<compile_context>
chip_gen: v6e
topology: v6e:2x2x1
jax: 0.10.0
libtpu: 0.0.40
codegen_flags: <defaults>
</compile_context>

<pallas_src>
import functools

import jax
import jax.numpy as jnp
from jax import lax
from jax.experimental import pallas as pl
from jax.experimental.pallas import tpu as pltpu


def _round_up(x, m):
    return (x + m - 1) // m * m


def _output_conv_kernel(x_ref, w1_ref, b_ref, w2_ref, mask_ref, o_ref, *,
                        Wp, L, T, CP):
    # x_ref   : (1, CP, Wx)  bf16  channel-major input; batch + padded spatial flattened
    #                        on the lane axis, front-padded by Wp+1 zeros and rear-padded
    #                        by 3*Wp+3 zeros so every tap slice is in bounds.
    # w1_ref  : (9, CP, CP)  bf16  conv1 weights (BN scale folded), per-tap matrices.
    # b_ref   : (CP, 1)      f32   folded BN bias.
    # w2_ref  : (9, COP, CP) bf16  conv2 weights, per-tap matrices.
    # mask_ref: (1, L+T)     f32   1.0 at real pixels of the padded grid, 0.0 on the ring.
    # o_ref   : (1, COP, L)  f32   conv2 output, channel-major, lane-dense.
    x = x_ref[0]                                          # (CP, Wx) bf16
    width1 = L + T
    offs = [dy * Wp + dx for dy in range(3) for dx in range(3)]

    # ---- conv1: 9 accumulating K=CP bf16 dots into an f32 accumulator ----
    y = jnp.dot(w1_ref[0], x[:, offs[0]:offs[0] + width1],
                preferred_element_type=jnp.float32)       # (CP, L+T) f32
    for k in range(1, 9):
        o = offs[k]
        y = y + jnp.dot(w1_ref[k], x[:, o:o + width1],
                        preferred_element_type=jnp.float32)

    # ---- folded BN bias + ReLU (f32), re-impose the zero padding ring, cast bf16 ----
    # (the +1,+1 shift onto the padded grid is already folded into the front pad)
    y = (jnp.maximum(y + b_ref[...], 0.0) * mask_ref[...]).astype(jnp.bfloat16)

    # ---- conv2: same tap-accumulation, f32 accumulate, f32 store ----
    z = jnp.dot(w2_ref[0], y[:, offs[0]:offs[0] + L],
                preferred_element_type=jnp.float32)       # (COP, L) f32
    for k in range(1, 9):
        o = offs[k]
        z = z + jnp.dot(w2_ref[k], y[:, o:o + L],
                        preferred_element_type=jnp.float32)
    o_ref[0, :, :] = z


def output_conv_pallas(x_nchw, w1_oihw, gamma, beta, running_mean, running_var,
                       w2_oihw, eps=1e-5, batch_per_block=1):
    """Forward pass of outputConv. x_nchw: (N, Cin, H, W) float32. Returns NCHW f32."""
    N, Cin, H, W = x_nchw.shape
    Cout = w2_oihw.shape[0]

    Hp, Wp = H + 2, W + 2
    S = Hp * Wp                       # flattened padded-spatial size per image
    # Clamp the batch block to a divisor of N so no zero-image work is ever scheduled.
    Nb = max(1, min(batch_per_block, N))
    while N % Nb:
        Nb -= 1
    G = N // Nb                       # grid steps (blocks of Nb images); >=2 when N>=2
    L = Nb * S                        # per-block content width on the lane axis
    T = 2 * Wp + 2                    # largest tap offset (dy=2, dx=2)
    F = Wp + 1                        # front zero pad: folds the re-pad shift of conv1
    R = 3 * Wp + 3                    # rear zero pad so every tap slice stays in bounds
    Wx = F + L + R                    # = L + 2*T

    CP = _round_up(Cin, 8)            # pad channels to the 8-sublane granule so all
    COP = _round_up(Cout, 8)          # slices / stores are tile-aligned

    # ---- input: NCHW -> channel-major bf16, batch merged onto the flat lane axis ----
    xf = x_nchw.astype(jnp.float32)
    xp = jnp.pad(xf, ((0, 0), (0, CP - Cin), (1, 1), (1, 1)))
    xcm = xp.reshape(G, Nb, CP, S).transpose(0, 2, 1, 3).reshape(G, CP, L)
    x_ext = jnp.pad(xcm, ((0, 0), (0, 0), (F, R))).astype(jnp.bfloat16)  # (G, CP, Wx)

    # ---- fold BatchNorm (eval mode) scale into conv1; keep only the f32 bias ----
    inv = (gamma / jnp.sqrt(running_var + eps)).astype(jnp.float32)
    w1s = w1_oihw.astype(jnp.float32) * inv[:, None, None, None]
    bias = (beta - running_mean * inv).astype(jnp.float32)

    w1p = jnp.pad(w1s, ((0, CP - Cin), (0, CP - Cin), (0, 0), (0, 0)))
    w2p = jnp.pad(w2_oihw.astype(jnp.float32),
                  ((0, COP - Cout), (0, CP - Cin), (0, 0), (0, 0)))
    # (co, ci, ky, kx) -> (ky, kx, co, ci) -> (9, C_out_pad, C_in_pad): per-tap matrices.
    w1taps = jnp.transpose(w1p, (2, 3, 0, 1)).reshape(9, CP, CP).astype(jnp.bfloat16)
    w2taps = jnp.transpose(w2p, (2, 3, 0, 1)).reshape(9, COP, CP).astype(jnp.bfloat16)
    bvec = jnp.pad(bias, (0, CP - Cin)).reshape(CP, 1)

    # ---- interior mask on the padded grid (zero pad ring between the two convs) ----
    u = jnp.arange(L + T)
    r = u % S
    py, px = r // Wp, r % Wp
    mask = ((u // S < Nb) & (py >= 1) & (py <= H) & (px >= 1) & (px <= W))
    mask = mask.astype(jnp.float32).reshape(1, L + T)

    kernel = functools.partial(_output_conv_kernel, Wp=Wp, L=L, T=T, CP=CP)

    out_cm = pl.pallas_call(
        kernel,
        out_shape=jax.ShapeDtypeStruct((G, COP, L), jnp.float32),
        grid_spec=pltpu.PrefetchScalarGridSpec(
            num_scalar_prefetch=0,
            grid=(G,),
            in_specs=[
                pl.BlockSpec((1, CP, Wx), lambda g: (g, 0, 0)),
                # Constant-index operands: single-buffer to reclaim VMEM for activations.
                pl.BlockSpec((9, CP, CP), lambda g: (0, 0, 0),
                             pipeline_mode=pl.Buffered(1)),
                pl.BlockSpec((CP, 1), lambda g: (0, 0),
                             pipeline_mode=pl.Buffered(1)),
                pl.BlockSpec((9, COP, CP), lambda g: (0, 0, 0),
                             pipeline_mode=pl.Buffered(1)),
                pl.BlockSpec((1, L + T), lambda g: (0, 0),
                             pipeline_mode=pl.Buffered(1)),
            ],
            out_specs=pl.BlockSpec((1, COP, L), lambda g: (g, 0, 0)),
        ),
        compiler_params=pltpu.CompilerParams(
            dimension_semantics=("parallel",),
            # 64 MiB: full headroom on v7x, generous on v5e/v6e (128 MiB physical).
            vmem_limit_bytes=64 * 1024 * 1024),
    )(x_ext, w1taps, bvec, w2taps, mask)

    # (G, COP, L) -> (N, Cout, H, W): each image's result sits on the padded Wp-stride
    # grid; undo the batch merge, crop the valid region, drop padded channels.
    out = out_cm.reshape(G, COP, Nb, Hp, Wp).transpose(0, 2, 1, 3, 4)
    out = out.reshape(G * Nb, COP, Hp, Wp)
    return out[:N, :Cout, :H, :W]


def output_conv_reference(x_nchw, w1_oihw, gamma, beta, running_mean,
                          running_var, w2_oihw, eps=1e-5):
    """Pure-JAX f32 reference for the PyTorch module in eval mode.

    BatchNorm2d in eval mode is an exact per-channel affine, so it is folded into
    conv1's weights/bias (mathematically identical to conv -> BN -> ReLU -> conv).
    """
    dn = ('NCHW', 'OIHW', 'NCHW')
    inv = gamma / jnp.sqrt(running_var + eps)
    w1f = w1_oihw * inv[:, None, None, None]
    b = beta - running_mean * inv
    y = lax.conv_general_dilated(x_nchw, w1f, (1, 1), 'SAME',
                                 dimension_numbers=dn)
    y = jnp.maximum(y + b[None, :, None, None], 0.0)
    z = lax.conv_general_dilated(y, w2_oihw, (1, 1), 'SAME',
                                 dimension_numbers=dn)
    return z


if __name__ == "__main__":
    key = jax.random.PRNGKey(0)
    N, Cin, Cout, H, W = 2, 4, 3, 16, 16

    k = jax.random.split(key, 7)
    x = jax.random.normal(k[0], (N, Cin, H, W), dtype=jnp.float32)
    # Deterministic synthetic parameters (shapes per nn.Conv2d / nn.BatchNorm2d).
    w1 = 0.1 * jax.random.normal(k[1], (Cin, Cin, 3, 3), dtype=jnp.float32)   # conv1 OIHW
    w2 = 0.1 * jax.random.normal(k[2], (Cout, Cin, 3, 3), dtype=jnp.float32)  # conv2 OIHW
    gamma = 1.0 + 0.1 * jax.random.normal(k[3], (Cin,), dtype=jnp.float32)
    beta = 0.1 * jax.random.normal(k[4], (Cin,), dtype=jnp.float32)
    running_mean = 0.1 * jax.random.normal(k[5], (Cin,), dtype=jnp.float32)
    running_var = jnp.abs(1.0 + 0.1 * jax.random.normal(k[6], (Cin,), dtype=jnp.float32))

    out = output_conv_pallas(x, w1, gamma, beta, running_mean, running_var, w2)
    out = jax.block_until_ready(out)

    ref = output_conv_reference(x, w1, gamma, beta, running_mean, running_var, w2)
    assert out.shape == (N, Cout, H, W)
    # bf16 matmul inputs with f32 accumulation vs. full-f32 reference -> loose tolerance.
    assert jnp.allclose(out, ref, atol=3e-2, rtol=3e-2), \
        f"max abs err {jnp.max(jnp.abs(out - ref))}"

    print("KERNEL_OK")
</pallas_src>

<mosaic_0001>
module attributes {stable_mosaic.version = 11 : i64} {
  func.func @_output_conv_kernel(%arg0: i32, %arg1: memref<1x8x400xbf16, #tpu.memory_space<vmem>>, %arg2: memref<9x8x8xbf16, #tpu.memory_space<vmem>>, %arg3: memref<8x1xf32, #tpu.memory_space<vmem>>, %arg4: memref<9x8x8xbf16, #tpu.memory_space<vmem>>, %arg5: memref<1x362xf32, #tpu.memory_space<vmem>>, %arg6: memref<1x8x324xf32, #tpu.memory_space<vmem>>) attributes {dimension_semantics = [#tpu.dimension_semantics<parallel>], iteration_bounds = array<i64: 2>, scalar_prefetch = 0 : i64, scratch_operands = 0 : i64, tpu.core_type = #tpu.core_type<tc>, window_params = [{transform_indices = @transform_0, window_bounds = array<i64: 1, 8, 400>}, {pipeline_mode = #tpu.pipeline_mode<synchronous>, transform_indices = @transform_1, window_bounds = array<i64: 9, 8, 8>}, {pipeline_mode = #tpu.pipeline_mode<synchronous>, transform_indices = @transform_2, window_bounds = array<i64: 8, 1>}, {pipeline_mode = #tpu.pipeline_mode<synchronous>, transform_indices = @transform_3, window_bounds = array<i64: 9, 8, 8>}, {pipeline_mode = #tpu.pipeline_mode<synchronous>, transform_indices = @transform_4, window_bounds = array<i64: 1, 362>}, {transform_indices = @transform_5, window_bounds = array<i64: 1, 8, 324>}]} {
    %c0 = arith.constant 0 : index
    %c0_0 = arith.constant 0 : index
    %c0_1 = arith.constant 0 : index
    %0 = vector.load %arg1[%c0, %c0_0, %c0_1] : memref<1x8x400xbf16, #tpu.memory_space<vmem>>, vector<1x8x400xbf16>
    %1 = vector.shape_cast %0 : vector<1x8x400xbf16> to vector<8x400xbf16>
    %c0_2 = arith.constant 0 : index
    %c0_3 = arith.constant 0 : index
    %c0_4 = arith.constant 0 : index
    %2 = vector.load %arg2[%c0_2, %c0_3, %c0_4] : memref<9x8x8xbf16, #tpu.memory_space<vmem>>, vector<1x8x8xbf16>
    %3 = vector.shape_cast %2 : vector<1x8x8xbf16> to vector<8x8xbf16>
    %4 = vector.extract_strided_slice %1 {offsets = [0, 0], sizes = [8, 362], strides = [1, 1]} : vector<8x400xbf16> to vector<8x362xbf16>
    %cst = arith.constant dense<0.000000e+00> : vector<8x362xf32>
    %5 = tpu.matmul %3, %4, %cst {dimension_numbers = #tpu.dot_dimension_numbers<[1], [0], [0], [1], [0, 0, 1, 1], [], []>} : vector<8x8xbf16>, vector<8x362xbf16>, vector<8x362xf32> -> vector<8x362xf32>
    %c1 = arith.constant 1 : index
    %c0_5 = arith.constant 0 : index
    %c0_6 = arith.constant 0 : index
    %6 = vector.load %arg2[%c1, %c0_5, %c0_6] : memref<9x8x8xbf16, #tpu.memory_space<vmem>>, vector<1x8x8xbf16>
    %7 = vector.shape_cast %6 : vector<1x8x8xbf16> to vector<8x8xbf16>
    %8 = vector.extract_strided_slice %1 {offsets = [0, 1], sizes = [8, 362], strides = [1, 1]} : vector<8x400xbf16> to vector<8x362xbf16>
    %cst_7 = arith.constant dense<0.000000e+00> : vector<8x362xf32>
    %9 = tpu.matmul %7, %8, %cst_7 {dimension_numbers = #tpu.dot_dimension_numbers<[1], [0], [0], [1], [0, 0, 1, 1], [], []>} : vector<8x8xbf16>, vector<8x362xbf16>, vector<8x362xf32> -> vector<8x362xf32>
    %10 = arith.addf %5, %9 : vector<8x362xf32>
    %c2 = arith.constant 2 : index
    %c0_8 = arith.constant 0 : index
    %c0_9 = arith.constant 0 : index
    %11 = vector.load %arg2[%c2, %c0_8, %c0_9] : memref<9x8x8xbf16, #tpu.memory_space<vmem>>, vector<1x8x8xbf16>
    %12 = vector.shape_cast %11 : vector<1x8x8xbf16> to vector<8x8xbf16>
    %13 = vector.extract_strided_slice %1 {offsets = [0, 2], sizes = [8, 362], strides = [1, 1]} : vector<8x400xbf16> to vector<8x362xbf16>
    %cst_10 = arith.constant dense<0.000000e+00> : vector<8x362xf32>
    %14 = tpu.matmul %12, %13, %cst_10 {dimension_numbers = #tpu.dot_dimension_numbers<[1], [0], [0], [1], [0, 0, 1, 1], [], []>} : vector<8x8xbf16>, vector<8x362xbf16>, vector<8x362xf32> -> vector<8x362xf32>
    %15 = arith.addf %10, %14 : vector<8x362xf32>
    %c3 = arith.constant 3 : index
    %c0_11 = arith.constant 0 : index
    %c0_12 = arith.constant 0 : index
    %16 = vector.load %arg2[%c3, %c0_11, %c0_12] : memref<9x8x8xbf16, #tpu.memory_space<vmem>>, vector<1x8x8xbf16>
    %17 = vector.shape_cast %16 : vector<1x8x8xbf16> to vector<8x8xbf16>
    %18 = vector.extract_strided_slice %1 {offsets = [0, 18], sizes = [8, 362], strides = [1, 1]} : vector<8x400xbf16> to vector<8x362xbf16>
    %cst_13 = arith.constant dense<0.000000e+00> : vector<8x362xf32>
    %19 = tpu.matmul %17, %18, %cst_13 {dimension_numbers = #tpu.dot_dimension_numbers<[1], [0], [0], [1], [0, 0, 1, 1], [], []>} : vector<8x8xbf16>, vector<8x362xbf16>, vector<8x362xf32> -> vector<8x362xf32>
    %20 = arith.addf %15, %19 : vector<8x362xf32>
    %c4 = arith.constant 4 : index
    %c0_14 = arith.constant 0 : index
    %c0_15 = arith.constant 0 : index
    %21 = vector.load %arg2[%c4, %c0_14, %c0_15] : memref<9x8x8xbf16, #tpu.memory_space<vmem>>, vector<1x8x8xbf16>
    %22 = vector.shape_cast %21 : vector<1x8x8xbf16> to vector<8x8xbf16>
    %23 = vector.extract_strided_slice %1 {offsets = [0, 19], sizes = [8, 362], strides = [1, 1]} : vector<8x400xbf16> to vector<8x362xbf16>
    %cst_16 = arith.constant dense<0.000000e+00> : vector<8x362xf32>
    %24 = tpu.matmul %22, %23, %cst_16 {dimension_numbers = #tpu.dot_dimension_numbers<[1], [0], [0], [1], [0, 0, 1, 1], [], []>} : vector<8x8xbf16>, vector<8x362xbf16>, vector<8x362xf32> -> vector<8x362xf32>
    %25 = arith.addf %20, %24 : vector<8x362xf32>
    %c5 = arith.constant 5 : index
    %c0_17 = arith.constant 0 : index
    %c0_18 = arith.constant 0 : index
    %26 = vector.load %arg2[%c5, %c0_17, %c0_18] : memref<9x8x8xbf16, #tpu.memory_space<vmem>>, vector<1x8x8xbf16>
    %27 = vector.shape_cast %26 : vector<1x8x8xbf16> to vector<8x8xbf16>
    %28 = vector.extract_strided_slice %1 {offsets = [0, 20], sizes = [8, 362], strides = [1, 1]} : vector<8x400xbf16> to vector<8x362xbf16>
    %cst_19 = arith.constant dense<0.000000e+00> : vector<8x362xf32>
    %29 = tpu.matmul %27, %28, %cst_19 {dimension_numbers = #tpu.dot_dimension_numbers<[1], [0], [0], [1], [0, 0, 1, 1], [], []>} : vector<8x8xbf16>, vector<8x362xbf16>, vector<8x362xf32> -> vector<8x362xf32>
    %30 = arith.addf %25, %29 : vector<8x362xf32>
    %c6 = arith.constant 6 : index
    %c0_20 = arith.constant 0 : index
    %c0_21 = arith.constant 0 : index
    %31 = vector.load %arg2[%c6, %c0_20, %c0_21] : memref<9x8x8xbf16, #tpu.memory_space<vmem>>, vector<1x8x8xbf16>
    %32 = vector.shape_cast %31 : vector<1x8x8xbf16> to vector<8x8xbf16>
    %33 = vector.extract_strided_slice %1 {offsets = [0, 36], sizes = [8, 362], strides = [1, 1]} : vector<8x400xbf16> to vector<8x362xbf16>
    %cst_22 = arith.constant dense<0.000000e+00> : vector<8x362xf32>
    %34 = tpu.matmul %32, %33, %cst_22 {dimension_numbers = #tpu.dot_dimension_numbers<[1], [0], [0], [1], [0, 0, 1, 1], [], []>} : vector<8x8xbf16>, vector<8x362xbf16>, vector<8x362xf32> -> vector<8x362xf32>
    %35 = arith.addf %30, %34 : vector<8x362xf32>
    %c7 = arith.constant 7 : index
    %c0_23 = arith.constant 0 : index
    %c0_24 = arith.constant 0 : index
    %36 = vector.load %arg2[%c7, %c0_23, %c0_24] : memref<9x8x8xbf16, #tpu.memory_space<vmem>>, vector<1x8x8xbf16>
    %37 = vector.shape_cast %36 : vector<1x8x8xbf16> to vector<8x8xbf16>
    %38 = vector.extract_strided_slice %1 {offsets = [0, 37], sizes = [8, 362], strides = [1, 1]} : vector<8x400xbf16> to vector<8x362xbf16>
    %cst_25 = arith.constant dense<0.000000e+00> : vector<8x362xf32>
    %39 = tpu.matmul %37, %38, %cst_25 {dimension_numbers = #tpu.dot_dimension_numbers<[1], [0], [0], [1], [0, 0, 1, 1], [], []>} : vector<8x8xbf16>, vector<8x362xbf16>, vector<8x362xf32> -> vector<8x362xf32>
    %40 = arith.addf %35, %39 : vector<8x362xf32>
    %c8 = arith.constant 8 : index
    %c0_26 = arith.constant 0 : index
    %c0_27 = arith.constant 0 : index
    %41 = vector.load %arg2[%c8, %c0_26, %c0_27] : memref<9x8x8xbf16, #tpu.memory_space<vmem>>, vector<1x8x8xbf16>
    %42 = vector.shape_cast %41 : vector<1x8x8xbf16> to vector<8x8xbf16>
    %43 = vector.extract_strided_slice %1 {offsets = [0, 38], sizes = [8, 362], strides = [1, 1]} : vector<8x400xbf16> to vector<8x362xbf16>
    %cst_28 = arith.constant dense<0.000000e+00> : vector<8x362xf32>
    %44 = tpu.matmul %42, %43, %cst_28 {dimension_numbers = #tpu.dot_dimension_numbers<[1], [0], [0], [1], [0, 0, 1, 1], [], []>} : vector<8x8xbf16>, vector<8x362xbf16>, vector<8x362xf32> -> vector<8x362xf32>
    %45 = arith.addf %40, %44 : vector<8x362xf32>
    %c0_29 = arith.constant 0 : index
    %c0_30 = arith.constant 0 : index
    %46 = vector.load %arg3[%c0_29, %c0_30] : memref<8x1xf32, #tpu.memory_space<vmem>>, vector<8x1xf32>
    %47 = vector.broadcast %46 : vector<8x1xf32> to vector<8x362xf32>
    %48 = arith.addf %45, %47 : vector<8x362xf32>
    %cst_31 = arith.constant 0.000000e+00 : f32
    %49 = vector.broadcast %cst_31 : f32 to vector<8x362xf32>
    %50 = arith.maximumf %48, %49 : vector<8x362xf32>
    %c0_32 = arith.constant 0 : index
    %c0_33 = arith.constant 0 : index
    %51 = vector.load %arg5[%c0_32, %c0_33] : memref<1x362xf32, #tpu.memory_space<vmem>>, vector<1x362xf32>
    %52 = vector.broadcast %51 : vector<1x362xf32> to vector<8x362xf32>
    %53 = arith.mulf %50, %52 : vector<8x362xf32>
    %54 = arith.truncf %53 : vector<8x362xf32> to vector<8x362xbf16>
    %c0_34 = arith.constant 0 : index
    %c0_35 = arith.constant 0 : index
    %c0_36 = arith.constant 0 : index
    %55 = vector.load %arg4[%c0_34, %c0_35, %c0_36] : memref<9x8x8xbf16, #tpu.memory_space<vmem>>, vector<1x8x8xbf16>
    %56 = vector.shape_cast %55 : vector<1x8x8xbf16> to vector<8x8xbf16>
    %57 = vector.extract_strided_slice %54 {offsets = [0, 0], sizes = [8, 324], strides = [1, 1]} : vector<8x362xbf16> to vector<8x324xbf16>
    %cst_37 = arith.constant dense<0.000000e+00> : vector<8x324xf32>
    %58 = tpu.matmul %56, %57, %cst_37 {dimension_numbers = #tpu.dot_dimension_numbers<[1], [0], [0], [1], [0, 0, 1, 1], [], []>} : vector<8x8xbf16>, vector<8x324xbf16>, vector<8x324xf32> -> vector<8x324xf32>
    %c1_38 = arith.constant 1 : index
    %c0_39 = arith.constant 0 : index
    %c0_40 = arith.constant 0 : index
    %59 = vector.load %arg4[%c1_38, %c0_39, %c0_40] : memref<9x8x8xbf16, #tpu.memory_space<vmem>>, vector<1x8x8xbf16>
    %60 = vector.shape_cast %59 : vector<1x8x8xbf16> to vector<8x8xbf16>
    %61 = vector.extract_strided_slice %54 {offsets = [0, 1], sizes = [8, 324], strides = [1, 1]} : vector<8x362xbf16> to vector<8x324xbf16>
    %cst_41 = arith.constant dense<0.000000e+00> : vector<8x324xf32>
    %62 = tpu.matmul %60, %61, %cst_41 {dimension_numbers = #tpu.dot_dimension_numbers<[1], [0], [0], [1], [0, 0, 1, 1], [], []>} : vector<8x8xbf16>, vector<8x324xbf16>, vector<8x324xf32> -> vector<8x324xf32>
    %63 = arith.addf %58, %62 : vector<8x324xf32>
    %c2_42 = arith.constant 2 : index
    %c0_43 = arith.constant 0 : index
    %c0_44 = arith.constant 0 : index
    %64 = vector.load %arg4[%c2_42, %c0_43, %c0_44] : memref<9x8x8xbf16, #tpu.memory_space<vmem>>, vector<1x8x8xbf16>
    %65 = vector.shape_cast %64 : vector<1x8x8xbf16> to vector<8x8xbf16>
    %66 = vector.extract_strided_slice %54 {offsets = [0, 2], sizes = [8, 324], strides = [1, 1]} : vector<8x362xbf16> to vector<8x324xbf16>
    %cst_45 = arith.constant dense<0.000000e+00> : vector<8x324xf32>
    %67 = tpu.matmul %65, %66, %cst_45 {dimension_numbers = #tpu.dot_dimension_numbers<[1], [0], [0], [1], [0, 0, 1, 1], [], []>} : vector<8x8xbf16>, vector<8x324xbf16>, vector<8x324xf32> -> vector<8x324xf32>
    %68 = arith.addf %63, %67 : vector<8x324xf32>
    %c3_46 = arith.constant 3 : index
    %c0_47 = arith.constant 0 : index
    %c0_48 = arith.constant 0 : index
    %69 = vector.load %arg4[%c3_46, %c0_47, %c0_48] : memref<9x8x8xbf16, #tpu.memory_space<vmem>>, vector<1x8x8xbf16>
    %70 = vector.shape_cast %69 : vector<1x8x8xbf16> to vector<8x8xbf16>
    %71 = vector.extract_strided_slice %54 {offsets = [0, 18], sizes = [8, 324], strides = [1, 1]} : vector<8x362xbf16> to vector<8x324xbf16>
    %cst_49 = arith.constant dense<0.000000e+00> : vector<8x324xf32>
    %72 = tpu.matmul %70, %71, %cst_49 {dimension_numbers = #tpu.dot_dimension_numbers<[1], [0], [0], [1], [0, 0, 1, 1], [], []>} : vector<8x8xbf16>, vector<8x324xbf16>, vector<8x324xf32> -> vector<8x324xf32>
    %73 = arith.addf %68, %72 : vector<8x324xf32>
    %c4_50 = arith.constant 4 : index
    %c0_51 = arith.constant 0 : index
    %c0_52 = arith.constant 0 : index
    %74 = vector.load %arg4[%c4_50, %c0_51, %c0_52] : memref<9x8x8xbf16, #tpu.memory_space<vmem>>, vector<1x8x8xbf16>
    %75 = vector.shape_cast %74 : vector<1x8x8xbf16> to vector<8x8xbf16>
    %76 = vector.extract_strided_slice %54 {offsets = [0, 19], sizes = [8, 324], strides = [1, 1]} : vector<8x362xbf16> to vector<8x324xbf16>
    %cst_53 = arith.constant dense<0.000000e+00> : vector<8x324xf32>
    %77 = tpu.matmul %75, %76, %cst_53 {dimension_numbers = #tpu.dot_dimension_numbers<[1], [0], [0], [1], [0, 0, 1, 1], [], []>} : vector<8x8xbf16>, vector<8x324xbf16>, vector<8x324xf32> -> vector<8x324xf32>
    %78 = arith.addf %73, %77 : vector<8x324xf32>
    %c5_54 = arith.constant 5 : index
    %c0_55 = arith.constant 0 : index
    %c0_56 = arith.constant 0 : index
    %79 = vector.load %arg4[%c5_54, %c0_55, %c0_56] : memref<9x8x8xbf16, #tpu.memory_space<vmem>>, vector<1x8x8xbf16>
    %80 = vector.shape_cast %79 : vector<1x8x8xbf16> to vector<8x8xbf16>
    %81 = vector.extract_strided_slice %54 {offsets = [0, 20], sizes = [8, 324], strides = [1, 1]} : vector<8x362xbf16> to vector<8x324xbf16>
    %cst_57 = arith.constant dense<0.000000e+00> : vector<8x324xf32>
    %82 = tpu.matmul %80, %81, %cst_57 {dimension_numbers = #tpu.dot_dimension_numbers<[1], [0], [0], [1], [0, 0, 1, 1], [], []>} : vector<8x8xbf16>, vector<8x324xbf16>, vector<8x324xf32> -> vector<8x324xf32>
    %83 = arith.addf %78, %82 : vector<8x324xf32>
    %c6_58 = arith.constant 6 : index
    %c0_59 = arith.constant 0 : index
    %c0_60 = arith.constant 0 : index
    %84 = vector.load %arg4[%c6_58, %c0_59, %c0_60] : memref<9x8x8xbf16, #tpu.memory_space<vmem>>, vector<1x8x8xbf16>
    %85 = vector.shape_cast %84 : vector<1x8x8xbf16> to vector<8x8xbf16>
    %86 = vector.extract_strided_slice %54 {offsets = [0, 36], sizes = [8, 324], strides = [1, 1]} : vector<8x362xbf16> to vector<8x324xbf16>
    %cst_61 = arith.constant dense<0.000000e+00> : vector<8x324xf32>
    %87 = tpu.matmul %85, %86, %cst_61 {dimension_numbers = #tpu.dot_dimension_numbers<[1], [0], [0], [1], [0, 0, 1, 1], [], []>} : vector<8x8xbf16>, vector<8x324xbf16>, vector<8x324xf32> -> vector<8x324xf32>
    %88 = arith.addf %83, %87 : vector<8x324xf32>
    %c7_62 = arith.constant 7 : index
    %c0_63 = arith.constant 0 : index
    %c0_64 = arith.constant 0 : index
    %89 = vector.load %arg4[%c7_62, %c0_63, %c0_64] : memref<9x8x8xbf16, #tpu.memory_space<vmem>>, vector<1x8x8xbf16>
    %90 = vector.shape_cast %89 : vector<1x8x8xbf16> to vector<8x8xbf16>
    %91 = vector.extract_strided_slice %54 {offsets = [0, 37], sizes = [8, 324], strides = [1, 1]} : vector<8x362xbf16> to vector<8x324xbf16>
    %cst_65 = arith.constant dense<0.000000e+00> : vector<8x324xf32>
    %92 = tpu.matmul %90, %91, %cst_65 {dimension_numbers = #tpu.dot_dimension_numbers<[1], [0], [0], [1], [0, 0, 1, 1], [], []>} : vector<8x8xbf16>, vector<8x324xbf16>, vector<8x324xf32> -> vector<8x324xf32>
    %93 = arith.addf %88, %92 : vector<8x324xf32>
    %c8_66 = arith.constant 8 : index
    %c0_67 = arith.constant 0 : index
    %c0_68 = arith.constant 0 : index
    %94 = vector.load %arg4[%c8_66, %c0_67, %c0_68] : memref<9x8x8xbf16, #tpu.memory_space<vmem>>, vector<1x8x8xbf16>
    %95 = vector.shape_cast %94 : vector<1x8x8xbf16> to vector<8x8xbf16>
    %96 = vector.extract_strided_slice %54 {offsets = [0, 38], sizes = [8, 324], strides = [1, 1]} : vector<8x362xbf16> to vector<8x324xbf16>
    %cst_69 = arith.constant dense<0.000000e+00> : vector<8x324xf32>
    %97 = tpu.matmul %95, %96, %cst_69 {dimension_numbers = #tpu.dot_dimension_numbers<[1], [0], [0], [1], [0, 0, 1, 1], [], []>} : vector<8x8xbf16>, vector<8x324xbf16>, vector<8x324xf32> -> vector<8x324xf32>
    %98 = arith.addf %93, %97 : vector<8x324xf32>
    %c0_70 = arith.constant 0 : index
    %c0_71 = arith.constant 0 : index
    %c0_72 = arith.constant 0 : index
    %99 = vector.load %arg6[%c0_70, %c0_71, %c0_72] : memref<1x8x324xf32, #tpu.memory_space<vmem>>, vector<1x8x324xf32>
    %100 = vector.shape_cast %99 : vector<1x8x324xf32> to vector<8x324xf32>
    %101 = vector.shape_cast %98 : vector<8x324xf32> to vector<1x8x324xf32>
    tpu.vector_store %arg6[%c0_70, %c0_71, %c0_72], %101 {strides = array<i32>} : memref<1x8x324xf32, #tpu.memory_space<vmem>>, vector<1x8x324xf32>,
    return
  }
  func.func @transform_0(%arg0: i32) -> (i32, i32, i32) {
    %c0_i32 = arith.constant 0 : i32
    %c0_i32_0 = arith.constant 0 : i32
    %c0_i32_1 = arith.constant 0 : i32
    return %arg0, %c0_i32, %c0_i32_0 : i32, i32, i32
  }
  func.func @transform_1(%arg0: i32) -> (i32, i32, i32) {
    %c0_i32 = arith.constant 0 : i32
    %c0_i32_0 = arith.constant 0 : i32
    %c0_i32_1 = arith.constant 0 : i32
    %c0_i32_2 = arith.constant 0 : i32
    return %c0_i32, %c0_i32_0, %c0_i32_1 : i32, i32, i32
  }
  func.func @transform_2(%arg0: i32) -> (i32, i32) {
    %c0_i32 = arith.constant 0 : i32
    %c0_i32_0 = arith.constant 0 : i32
    %c0_i32_1 = arith.constant 0 : i32
    return %c0_i32, %c0_i32_0 : i32, i32
  }
  func.func @transform_3(%arg0: i32) -> (i32, i32, i32) {
    %c0_i32 = arith.constant 0 : i32
    %c0_i32_0 = arith.constant 0 : i32
    %c0_i32_1 = arith.constant 0 : i32
    %c0_i32_2 = arith.constant 0 : i32
    return %c0_i32, %c0_i32_0, %c0_i32_1 : i32, i32, i32
  }
  func.func @transform_4(%arg0: i32) -> (i32, i32) {
    %c0_i32 = arith.constant 0 : i32
    %c0_i32_0 = arith.constant 0 : i32
    %c0_i32_1 = arith.constant 0 : i32
    return %c0_i32, %c0_i32_0 : i32, i32
  }
  func.func @transform_5(%arg0: i32) -> (i32, i32, i32) {
    %c0_i32 = arith.constant 0 : i32
    %c0_i32_0 = arith.constant 0 : i32
    %c0_i32_1 = arith.constant 0 : i32
    return %arg0, %c0_i32, %c0_i32_0 : i32, i32, i32
  }
}

</mosaic_0001>

<llo_original>
// kernel: tpu_custom_call.1
$region0: #{tpu_custom_call.1}
  #allocation0 [shape = 'u32[]', space=smem, size = 0x4, offset = 0x4, fixed_abs, tag = 'smem constant byte address 0x4 - core index']
  #allocation1 [shape = 'u32[144,128]{1,0:T(1,128)}', space=vmem, size = 0x12000, scoped, tag = 'internal scratch']
  %s0 = inlined_call_operand.vmem [shape: bf16[2,8,400], index: 0, kind: input, shape index: {}]
  %s1 = inlined_call_operand.vmem [shape: bf16[9,8,8], index: 1, kind: input, shape index: {}]
  %s2 = inlined_call_operand.vmem [shape: f32[8,1], index: 2, kind: input, shape index: {}]
  %s3 = inlined_call_operand.vmem [shape: bf16[9,8,8], index: 3, kind: input, shape index: {}]
  %s4 = inlined_call_operand.vmem [shape: f32[1,362], index: 4, kind: input, shape index: {}]
  %s5 = inlined_call_operand.hbm [shape: f32[2,8,324], index: 5, kind: output, shape index: {}]
  %s6 = sld [smem:[#allocation0]]
  $region53: #{tpu_custom_call.1} parent=0
    _
  %s8 = ssub.s32 1, %s6
  %s9 = scalar_select 0, %s8, %s6
  $region1: #{tpu_custom_call.1} parent=0
    #allocation2 [shape = 'u8[24576]{0}', space=vmem, size = 0x6000, scoped, tag = 'output window, operand 0']
    #allocation3 [shape = 's32[2]{0}', space=sflag, size = 0x8, scoped, tag = 'scoped memory for tpu_custom_call.1']
    %10 = vsyncpa [#allocation3], 0
    %s11 = scalar_lea.sflag [#allocation3], 1
    %12 = vsyncpa %s11, 0
    loop: start=0, step=1, limit=4
    $region2: #{tpu_custom_call.1} parent=1 // loop_pre_header
      _
    $region3: #{tpu_custom_call.1} parent=1 // loop_header
      %s14 = sphi 0, %s18
      %p15 = scmp.ge.s32.totalorder %s14, 4
      %s24 = sphi 0, %s26
      %s27 = sphi 0, %s24
      %s28 = sphi 0, %s27
      %s44 = sphi 0, %s28
      %s48 = sphi 0, %s48
      %s50 = sphi 0, %s48
      %s51 = sphi 0, %s50
      %s65 = sphi 0, %s51
      %s69 = sphi 0, %s69
      %s71 = sphi 0, %s69
      %s72 = sphi 0, %s71
      %s86 = sphi 0, %s72
      %s90 = sphi 0, %s90
      %s92 = sphi 0, %s90
      %s93 = sphi 0, %s92
      %s107 = sphi 0, %s93
      %s111 = sphi 0, %s111
      %s113 = sphi 0, %s111
      %s114 = sphi 0, %s113
      %s128 = sphi 0, %s114
      %s134 = sphi 0, %s136
      %s137 = sphi 0, %s134
      %s138 = sphi 0, %s137
      %s154 = sphi 0, %s138
    $region4: #{tpu_custom_call.1} parent=1 // loop_header_branch
      %17 = sbr.rel (%p15) target = $region8
    $region5: #{tpu_custom_call.1} parent=1 // loop_body
      %s19 = ssub.s32 %s14, 1
      %s20 = ssub.s32 %s14, 2
      %s21 = sadd.s32 %s14, 1
      %s22 = ssub.s32 %s14, %s21
      %p23 = scmp.eq.s32.totalorder %s22, 0
      %s25 = sadd.s32 %s24, 1
      %s26 = scalar_select %p23, %s24, %s25
      %p29 = pneg %p23
      %p30 = scmp.eq.s32.totalorder %s14, 1
      %p31 = por %p29, %p30
      %p32 = scmp.ne.s32.totalorder %s24, %s27
      %p33 = scmp.eq.s32.totalorder %s14, 0
      %p34 = por %p32, %p33
      %p35 = scmp.ne.s32.totalorder %s24, %s27
      %p36 = scmp.eq.s32.totalorder %s19, 1
      %p37 = por %p35, %p36
      %p38 = scmp.ne.s32.totalorder %s27, %s28
      %p39 = scmp.eq.s32.totalorder %s19, 0
      %p40 = por %p38, %p39
      %p41 = scmp.ne.s32.totalorder %s27, %s28
      %p42 = scmp.eq.s32.totalorder %s20, 1
      %p43 = por %p41, %p42
      %p45 = scmp.ne.s32.totalorder %s28, %s44
      %p46 = scmp.eq.s32.totalorder %s20, 0
      %p47 = por %p45, %p46
      %s49 = sadd.s32 %s48, 1
      %p52 = scmp.eq.s32.totalorder %s14, 1
      %p53 = scmp.ne.s32.totalorder %s48, %s50
      %p54 = scmp.eq.s32.totalorder %s14, 0
      %p55 = por %p53, %p54
      %p56 = scmp.ne.s32.totalorder %s48, %s50
      %p57 = scmp.eq.s32.totalorder %s19, 1
      %p58 = por %p56, %p57
      %p59 = scmp.ne.s32.totalorder %s50, %s51
      %p60 = scmp.eq.s32.totalorder %s19, 0
      %p61 = por %p59, %p60
      %p62 = scmp.ne.s32.totalorder %s50, %s51
      %p63 = scmp.eq.s32.totalorder %s20, 1
      %p64 = por %p62, %p63
      %p66 = scmp.ne.s32.totalorder %s51, %s65
      %p67 = scmp.eq.s32.totalorder %s20, 0
      %p68 = por %p66, %p67
      %s70 = sadd.s32 %s69, 1
      %p73 = scmp.eq.s32.totalorder %s14, 1
      %p74 = scmp.ne.s32.totalorder %s69, %s71
      %p75 = scmp.eq.s32.totalorder %s14, 0
      %p76 = por %p74, %p75
      %p77 = scmp.ne.s32.totalorder %s69, %s71
      %p78 = scmp.eq.s32.totalorder %s19, 1
      %p79 = por %p77, %p78
      %p80 = scmp.ne.s32.totalorder %s71, %s72
      %p81 = scmp.eq.s32.totalorder %s19, 0
      %p82 = por %p80, %p81
      %p83 = scmp.ne.s32.totalorder %s71, %s72
      %p84 = scmp.eq.s32.totalorder %s20, 1
      %p85 = por %p83, %p84
      %p87 = scmp.ne.s32.totalorder %s72, %s86
      %p88 = scmp.eq.s32.totalorder %s20, 0
      %p89 = por %p87, %p88
      %s91 = sadd.s32 %s90, 1
      %p94 = scmp.eq.s32.totalorder %s14, 1
      %p95 = scmp.ne.s32.totalorder %s90, %s92
      %p96 = scmp.eq.s32.totalorder %s14, 0
      %p97 = por %p95, %p96
      %p98 = scmp.ne.s32.totalorder %s90, %s92
      %p99 = scmp.eq.s32.totalorder %s19, 1
      %p100 = por %p98, %p99
      %p101 = scmp.ne.s32.totalorder %s92, %s93
      %p102 = scmp.eq.s32.totalorder %s19, 0
      %p103 = por %p101, %p102
      %p104 = scmp.ne.s32.totalorder %s92, %s93
      %p105 = scmp.eq.s32.totalorder %s20, 1
      %p106 = por %p104, %p105
      %p108 = scmp.ne.s32.totalorder %s93, %s107
      %p109 = scmp.eq.s32.totalorder %s20, 0
      %p110 = por %p108, %p109
      %s112 = sadd.s32 %s111, 1
      %p115 = scmp.eq.s32.totalorder %s14, 1
      %p116 = scmp.ne.s32.totalorder %s111, %s113
      %p117 = scmp.eq.s32.totalorder %s14, 0
      %p118 = por %p116, %p117
      %p119 = scmp.ne.s32.totalorder %s111, %s113
      %p120 = scmp.eq.s32.totalorder %s19, 1
      %p121 = por %p119, %p120
      %p122 = scmp.ne.s32.totalorder %s113, %s114
      %p123 = scmp.eq.s32.totalorder %s19, 0
      %p124 = por %p122, %p123
      %p125 = scmp.ne.s32.totalorder %s113, %s114
      %p126 = scmp.eq.s32.totalorder %s20, 1
      %p127 = por %p125, %p126
      %p129 = scmp.ne.s32.totalorder %s114, %s128
      %p130 = scmp.eq.s32.totalorder %s20, 0
      %p131 = por %p129, %p130
      %s132 = ssub.s32 %s14, %s21
      %p133 = scmp.eq.s32.totalorder %s132, 0
      %s135 = sadd.s32 %s134, 1
      %s136 = scalar_select %p133, %s134, %s135
      %p139 = pneg %p133
      %p140 = scmp.eq.s32.totalorder %s14, 1
      %p141 = por %p139, %p140
      %p142 = scmp.ne.s32.totalorder %s134, %s137
      %p143 = scmp.eq.s32.totalorder %s14, 0
      %p144 = por %p142, %p143
      %p145 = scmp.ne.s32.totalorder %s134, %s137
      %p146 = scmp.eq.s32.totalorder %s19, 1
      %p147 = por %p145, %p146
      %p148 = scmp.ne.s32.totalorder %s137, %s138
      %p149 = scmp.eq.s32.totalorder %s19, 0
      %p150 = por %p148, %p149
      %p151 = scmp.ne.s32.totalorder %s137, %s138
      %p152 = scmp.eq.s32.totalorder %s20, 1
      %p153 = por %p151, %p152
      %p155 = scmp.ne.s32.totalorder %s138, %s154
      %p156 = scmp.eq.s32.totalorder %s20, 0
      %p157 = por %p155, %p156
      %p158 = scmp.le.s32.totalorder 1, %s14
      %p159 = scmp.lt.s32.totalorder %s14, 3
      %p160 = pnand %p158, %p159
      %p161 = pneg %p160
      // Predicated region
      $region9: #{tpu_custom_call.1} parent=5 // pred_check
        _
      $region10: #{tpu_custom_call.1} parent=5 // pred_check_branch
        %163 = sbr.rel (%p160) target = $region12
      $region11: #{tpu_custom_call.1} parent=5 // pred_region
        %s164 = ssub.s32 %s14, 1
        // Predicated region
        $region13: #{tpu_custom_call.1} parent=11 // pred_check
          %p165 = pneg %p61
        $region14: #{tpu_custom_call.1} parent=11 // pred_check_branch
          %167 = sbr.rel (%p165) target = $region16
        $region15: #{tpu_custom_call.1} parent=11 // pred_region
          _
        $region16: #{tpu_custom_call.1} parent=11 // pred_fallthru
          _
        // Predicated region
        $region17: #{tpu_custom_call.1} parent=11 // pred_check
          %p168 = pneg %p82
        $region18: #{tpu_custom_call.1} parent=11 // pred_check_branch
          %170 = sbr.rel (%p168) target = $region20
        $region19: #{tpu_custom_call.1} parent=11 // pred_region
          _
        $region20: #{tpu_custom_call.1} parent=11 // pred_fallthru
          _
        // Predicated region
        $region21: #{tpu_custom_call.1} parent=11 // pred_check
          %p171 = pneg %p103
        $region22: #{tpu_custom_call.1} parent=11 // pred_check_branch
          %173 = sbr.rel (%p171) target = $region24
        $region23: #{tpu_custom_call.1} parent=11 // pred_region
          _
        $region24: #{tpu_custom_call.1} parent=11 // pred_fallthru
          _
        // Predicated region
        $region25: #{tpu_custom_call.1} parent=11 // pred_check
          %p174 = pneg %p124
        $region26: #{tpu_custom_call.1} parent=11 // pred_check_branch
          %176 = sbr.rel (%p174) target = $region28
        $region27: #{tpu_custom_call.1} parent=11 // pred_region
          _
        $region28: #{tpu_custom_call.1} parent=11 // pred_fallthru
          _
      $region12: #{tpu_custom_call.1} parent=5 // pred_fallthru
        _
      %p177 = scmp.lt.s32.totalorder %s14, 2
      // Predicated region
      $region29: #{tpu_custom_call.1} parent=5 // pred_check
        %p178 = pneg %p177
      $region30: #{tpu_custom_call.1} parent=5 // pred_check_branch
        %180 = sbr.rel (%p178) target = $region32
      $region31: #{tpu_custom_call.1} parent=5 // pred_region
        // Predicated region
        $region33: #{tpu_custom_call.1} parent=31 // pred_check
          %p181 = pneg %p34
        $region34: #{tpu_custom_call.1} parent=31 // pred_check_branch
          %183 = sbr.rel (%p181) target = $region36
        $region35: #{tpu_custom_call.1} parent=31 // pred_region
          %p184 = scmp.lt.s32.totalorder %s14, 1
          %s185 = scalar_select %p184, %s14, 1
          %s186 = smul.addr %s185, 4
          %s187 = smul.addr %s186, 4
          %s188 = scalar_lea.vmem %s0, %s187
        $region36: #{tpu_custom_call.1} parent=31 // pred_fallthru
          _
      $region32: #{tpu_custom_call.1} parent=5 // pred_fallthru
        _
      %p189 = scmp.le.s32.totalorder 1, %s14
      %p190 = scmp.lt.s32.totalorder %s14, 3
      %p191 = pnand %p189, %p190
      %p192 = pneg %p191
      // Predicated region
      $region37: #{tpu_custom_call.1} parent=5 // pred_check
        _
      $region38: #{tpu_custom_call.1} parent=5 // pred_check_branch
        %194 = sbr.rel (%p191) target = $region40
      $region39: #{tpu_custom_call.1} parent=5 // pred_region
        %s195 = ssub.s32 %s14, 1
        %p196 = scmp.lt.s32.totalorder %s19, 1
        %s197 = scalar_select %p196, %s19, 1
        %s198 = smul.addr %s197, 4
        %s199 = smul.addr %s198, 4
        %s200 = scalar_lea.vmem %s0, %s199
        %p201 = pneg %p40
        %p202 = pneg %p37
        %p203 = pneg %p61
        %p204 = pneg %p58
        %p205 = pneg %p82
        %p206 = pneg %p79
        %p207 = pneg %p103
        %p208 = pneg %p100
        %p209 = pneg %p124
        %p210 = pneg %p121
        %p211 = pneg %p150
        %p212 = pneg %p147
        %s213 = sand.u32 %s137, 1
        %s214 = scalar_lea.sflag [#allocation3], %s213
        %s215 = sand.u32 %s137, 1
        %s216 = smul.addr %s215, 24
        %s217 = scalar_lea.vmem [#allocation2], %s216
        %p218 = scmp.lt.s32.totalorder %s19, 1
        %s219 = scalar_select %p218, %s19, 1
        %s220 = smul.addr %s219, 4
        %s221 = smul.addr %s220, 4
        %s222 = scalar_lea.vmem %s0, %s221
        %v224 = vld [vmem:[%s222] sm:$0xff]
        %v225 = vld [vmem:[%s222 + $0x8] sm:$0xff]
        %v226 = vld [vmem:[%s1] sm:$0xf]
        %s227 = scalar_lea.vmem %s1, 4
        %v228 = vld [vmem:[%s227] sm:$0xf]
        %v231 = vunpack.c.l.b16 %v224
        %v232 = vunpack.c.h.b16 %v224
        %v233 = vunpack.c.l.b16 %v225
        %v234 = vpack.c.b16 %v231, %v231
        %v235 = vpack.c.b16 %v232, %v232
        %v236 = vpack.c.b16 %v233, %v233
        %237 = vrot.lane.b32.xlu0 %v234, 127
        %v238 = vpop.permute.xlu0 %237
        %239 = vrot.lane.b32.xlu0 %v235, 127
        %v240 = vpop.permute.xlu0 %239
        %241 = vrot.lane.b32.xlu0 %v236, 127
        %v242 = vpop.permute.xlu0 %241
        %vm243 = vcmask 1039360
        %v244 = vsel %vm243, %v238, %v240
        %v245 = vsel %vm243, %v240, %v242
        %vm246 = vcmask 64512
        %v248 = vsel %vm246, %v228, 0
        %vm250 = vcmask 1043456
        %v252 = vsel %vm250, %v244, 0
        %v255 = vsel %vm250, %v245, 0
        %v258 = vsel %vm250, %v242, 0
        %260 = vmatprep.subr.bf16.mxu0 0
        %261 = vmatpush1.bf16.msra.mxu0 0
        %262 = vmatprep.subr.bf16.mxu0 0
        %263 = vmatpush1.bf16.msra.mxu0 0
        %264 = vmatprep.subr.bf16.mxu0 0
        %265 = vmatpush1.bf16.msra.mxu0 0
        %266 = vmatprep.subr.bf16.mxu0 0
        %267 = vmatpush1.bf16.msra.mxu0 0
        %268 = vmatprep.subr.bf16.mxu0 0
        %269 = vmatpush1.bf16.msra.mxu0 0
        %270 = vmatprep.subr.bf16.mxu0 0
        %271 = vmatpush1.bf16.msra.mxu0 0
        %272 = vmatprep.subr.bf16.mxu0 0
        %273 = vmatpush1.bf16.msra.mxu0 0
        %274 = vmatprep.subr.bf16.mxu0 %v255
        %275 = vmatpush1.bf16.msra.mxu0 %v252
        %276 = vmatprep.subr.bf16.mxu0 0
        %277 = vmatpush2.bf16.msra.mxu0 0
        %278 = vmatprep.subr.bf16.mxu0 0
        %279 = vmatpush2.bf16.msra.mxu0 0
        %280 = vmatprep.subr.bf16.mxu0 0
        %281 = vmatpush2.bf16.msra.mxu0 0
        %282 = vmatprep.subr.bf16.mxu0 0
        %283 = vmatpush2.bf16.msra.mxu0 0
        %284 = vmatprep.subr.bf16.mxu0 0
        %285 = vmatpush2.bf16.msra.mxu0 0
        %286 = vmatprep.subr.bf16.mxu0 0
        %287 = vmatpush2.bf16.msra.mxu0 0
        %288 = vmatprep.subr.bf16.mxu0 0
        %289 = vmatpush2.bf16.msra.mxu0 0
        %290 = vmatprep.subr.bf16.mxu0 0
        %291 = vmatpush2.bf16.msra.mxu0 0
        %292 = vmatprep.mubr.bf16.mxu0 0
        %293 = vmatmul.mubr.bf16.gmra.mxu0 %v248
        %v294 = vpop.f32.mrf.mxu0
        %v295 = vadd.f32 0.0, %v294
        %v296 = vpop.f32.mrf.mxu0
        %v297 = vadd.f32 0.0, %v296
        %v298 = vpop.f32.mrf.mxu0
        %v299 = vpop.f32.mrf.mxu0
        %300 = vdwg.mxu0
        %301 = vmatprep.subr.bf16.mxu0 0
        %302 = vmatpush1.bf16.msra.mxu0 0
        %303 = vmatprep.subr.bf16.mxu0 0
        %304 = vmatpush1.bf16.msra.mxu0 0
        %305 = vmatprep.subr.bf16.mxu0 0
        %306 = vmatpush1.bf16.msra.mxu0 0
        %307 = vmatprep.subr.bf16.mxu0 0
        %308 = vmatpush1.bf16.msra.mxu0 0
        %309 = vmatprep.subr.bf16.mxu0 0
        %310 = vmatpush1.bf16.msra.mxu0 0
        %311 = vmatprep.subr.bf16.mxu0 0
        %312 = vmatpush1.bf16.msra.mxu0 0
        %313 = vmatprep.subr.bf16.mxu0 0
        %314 = vmatpush1.bf16.msra.mxu0 0
        %315 = vmatprep.subr.bf16.mxu0 0
        %316 = vmatpush1.bf16.msra.mxu0 %v258
        %317 = vmatprep.subr.bf16.mxu0 0
        %318 = vmatpush2.bf16.msra.mxu0 0
        %319 = vmatprep.subr.bf16.mxu0 0
        %320 = vmatpush2.bf16.msra.mxu0 0
        %321 = vmatprep.subr.bf16.mxu0 0
        %322 = vmatpush2.bf16.msra.mxu0 0
        %323 = vmatprep.subr.bf16.mxu0 0
        %324 = vmatpush2.bf16.msra.mxu0 0
        %325 = vmatprep.subr.bf16.mxu0 0
        %326 = vmatpush2.bf16.msra.mxu0 0
        %327 = vmatprep.subr.bf16.mxu0 0
        %328 = vmatpush2.bf16.msra.mxu0 0
        %329 = vmatprep.subr.bf16.mxu0 0
        %330 = vmatpush2.bf16.msra.mxu0 0
        %331 = vmatprep.subr.bf16.mxu0 0
        %332 = vmatpush2.bf16.msra.mxu0 0
        %333 = vmatprep.mubr.bf16.mxu0 0
        %334 = vmatmul.mubr.bf16.gmra.mxu0 %v248
        %v335 = vpop.f32.mrf.mxu0
        %v336 = vadd.f32 0.0, %v335
        %v337 = vpop.f32.mrf.mxu0
        %v338 = vpop.f32.mrf.mxu0
        %v339 = vpop.f32.mrf.mxu0
        %340 = vdwg.mxu0
        %v342 = vsel %vm246, %v226, 0
        %v345 = vsel %vm250, %v234, 0
        %v348 = vsel %vm250, %v235, 0
        %v351 = vsel %vm250, %v236, 0
        %353 = vmatprep.subr.bf16.mxu0 0
        %354 = vmatpush1.bf16.msra.mxu0 0
        %355 = vmatprep.subr.bf16.mxu0 0
        %356 = vmatpush1.bf16.msra.mxu0 0
        %357 = vmatprep.subr.bf16.mxu0 0
        %358 = vmatpush1.bf16.msra.mxu0 0
        %359 = vmatprep.subr.bf16.mxu0 0
        %360 = vmatpush1.bf16.msra.mxu0 0
        %361 = vmatprep.subr.bf16.mxu0 0
        %362 = vmatpush1.bf16.msra.mxu0 0
        %363 = vmatprep.subr.bf16.mxu0 0
        %364 = vmatpush1.bf16.msra.mxu0 0
        %365 = vmatprep.subr.bf16.mxu0 0
        %366 = vmatpush1.bf16.msra.mxu0 0
        %367 = vmatprep.subr.bf16.mxu0 %v348
        %368 = vmatpush1.bf16.msra.mxu0 %v345
        %369 = vmatprep.subr.bf16.mxu0 0
        %370 = vmatpush2.bf16.msra.mxu0 0
        %371 = vmatprep.subr.bf16.mxu0 0
        %372 = vmatpush2.bf16.msra.mxu0 0
        %373 = vmatprep.subr.bf16.mxu0 0
        %374 = vmatpush2.bf16.msra.mxu0 0
        %375 = vmatprep.subr.bf16.mxu0 0
        %376 = vmatpush2.bf16.msra.mxu0 0
        %377 = vmatprep.subr.bf16.mxu0 0
        %378 = vmatpush2.bf16.msra.mxu0 0
        %379 = vmatprep.subr.bf16.mxu0 0
        %380 = vmatpush2.bf16.msra.mxu0 0
        %381 = vmatprep.subr.bf16.mxu0 0
        %382 = vmatpush2.bf16.msra.mxu0 0
        %383 = vmatprep.subr.bf16.mxu0 0
        %384 = vmatpush2.bf16.msra.mxu0 0
        %385 = vmatprep.mubr.bf16.mxu0 0
        %386 = vmatmul.mubr.bf16.gmra.mxu0 %v342
        %v387 = vpop.f32.mrf.mxu0
        %v388 = vadd.f32 %v295, %v387
        %v389 = vpop.f32.mrf.mxu0
        %v390 = vadd.f32 %v297, %v389
        %v391 = vpop.f32.mrf.mxu0
        %v392 = vpop.f32.mrf.mxu0
        %393 = vdwg.mxu0
        %394 = vmatprep.subr.bf16.mxu0 0
        %395 = vmatpush1.bf16.msra.mxu0 0
        %396 = vmatprep.subr.bf16.mxu0 0
        %397 = vmatpush1.bf16.msra.mxu0 0
        %398 = vmatprep.subr.bf16.mxu0 0
        %399 = vmatpush1.bf16.msra.mxu0 0
        %400 = vmatprep.subr.bf16.mxu0 0
        %401 = vmatpush1.bf16.msra.mxu0 0
        %402 = vmatprep.subr.bf16.mxu0 0
        %403 = vmatpush1.bf16.msra.mxu0 0
        %404 = vmatprep.subr.bf16.mxu0 0
        %405 = vmatpush1.bf16.msra.mxu0 0
        %406 = vmatprep.subr.bf16.mxu0 0
        %407 = vmatpush1.bf16.msra.mxu0 0
        %408 = vmatprep.subr.bf16.mxu0 0
        %409 = vmatpush1.bf16.msra.mxu0 %v351
        %410 = vmatprep.subr.bf16.mxu0 0
        %411 = vmatpush2.bf16.msra.mxu0 0
        %412 = vmatprep.subr.bf16.mxu0 0
        %413 = vmatpush2.bf16.msra.mxu0 0
        %414 = vmatprep.subr.bf16.mxu0 0
        %415 = vmatpush2.bf16.msra.mxu0 0
        %416 = vmatprep.subr.bf16.mxu0 0
        %417 = vmatpush2.bf16.msra.mxu0 0
        %418 = vmatprep.subr.bf16.mxu0 0
        %419 = vmatpush2.bf16.msra.mxu0 0
        %420 = vmatprep.subr.bf16.mxu0 0
        %421 = vmatpush2.bf16.msra.mxu0 0
        %422 = vmatprep.subr.bf16.mxu0 0
        %423 = vmatpush2.bf16.msra.mxu0 0
        %424 = vmatprep.subr.bf16.mxu0 0
        %425 = vmatpush2.bf16.msra.mxu0 0
        %426 = vmatprep.mubr.bf16.mxu0 0
        %427 = vmatmul.mubr.bf16.gmra.mxu0 %v342
        %v428 = vpop.f32.mrf.mxu0
        %v429 = vadd.f32 %v336, %v428
        %v430 = vpop.f32.mrf.mxu0
        %v431 = vpop.f32.mrf.mxu0
        %v432 = vpop.f32.mrf.mxu0
        %433 = vdwg.mxu0
        %s434 = scalar_lea.vmem %s1, 8
        %v435 = vld [vmem:[%s434] sm:$0xf]
        %436 = vrot.lane.b32.xlu0 %v234, 126
        %v437 = vpop.permute.xlu0 %436
        %438 = vrot.lane.b32.xlu0 %v235, 126
        %v439 = vpop.permute.xlu0 %438
        %440 = vrot.lane.b32.xlu0 %v236, 126
        %v441 = vpop.permute.xlu0 %440
        %vm442 = vcmask 1031168
        %v443 = vsel %vm442, %v437, %v439
        %v444 = vsel %vm442, %v439, %v441
        %v446 = vsel %vm246, %v435, 0
        %v449 = vsel %vm250, %v443, 0
        %v452 = vsel %vm250, %v444, 0
        %v455 = vsel %vm250, %v441, 0
        %457 = vmatprep.subr.bf16.mxu0 0
        %458 = vmatpush1.bf16.msra.mxu0 0
        %459 = vmatprep.subr.bf16.mxu0 0
        %460 = vmatpush1.bf16.msra.mxu0 0
        %461 = vmatprep.subr.bf16.mxu0 0
        %462 = vmatpush1.bf16.msra.mxu0 0
        %463 = vmatprep.subr.bf16.mxu0 0
        %464 = vmatpush1.bf16.msra.mxu0 0
        %465 = vmatprep.subr.bf16.mxu0 0
        %466 = vmatpush1.bf16.msra.mxu0 0
        %467 = vmatprep.subr.bf16.mxu0 0
        %468 = vmatpush1.bf16.msra.mxu0 0
        %469 = vmatprep.subr.bf16.mxu0 0
        %470 = vmatpush1.bf16.msra.mxu0 0
        %471 = vmatprep.subr.bf16.mxu0 %v452
        %472 = vmatpush1.bf16.msra.mxu0 %v449
        %473 = vmatprep.subr.bf16.mxu0 0
        %474 = vmatpush2.bf16.msra.mxu0 0
        %475 = vmatprep.subr.bf16.mxu0 0
        %476 = vmatpush2.bf16.msra.mxu0 0
        %477 = vmatprep.subr.bf16.mxu0 0
        %478 = vmatpush2.bf16.msra.mxu0 0
        %479 = vmatprep.subr.bf16.mxu0 0
        %480 = vmatpush2.bf16.msra.mxu0 0
        %481 = vmatprep.subr.bf16.mxu0 0
        %482 = vmatpush2.bf16.msra.mxu0 0
        %483 = vmatprep.subr.bf16.mxu0 0
        %484 = vmatpush2.bf16.msra.mxu0 0
        %485 = vmatprep.subr.bf16.mxu0 0
        %486 = vmatpush2.bf16.msra.mxu0 0
        %487 = vmatprep.subr.bf16.mxu0 0
        %488 = vmatpush2.bf16.msra.mxu0 0
        %489 = vmatprep.mubr.bf16.mxu0 0
        %490 = vmatmul.mubr.bf16.gmra.mxu0 %v446
        %v491 = vpop.f32.mrf.mxu0
        %v492 = vadd.f32 0.0, %v491
        %v493 = vpop.f32.mrf.mxu0
        %v494 = vadd.f32 0.0, %v493
        %v495 = vpop.f32.mrf.mxu0
        %v496 = vpop.f32.mrf.mxu0
        %497 = vdwg.mxu0
        %498 = vmatprep.subr.bf16.mxu0 0
        %499 = vmatpush1.bf16.msra.mxu0 0
        %500 = vmatprep.subr.bf16.mxu0 0
        %501 = vmatpush1.bf16.msra.mxu0 0
        %502 = vmatprep.subr.bf16.mxu0 0
        %503 = vmatpush1.bf16.msra.mxu0 0
        %504 = vmatprep.subr.bf16.mxu0 0
        %505 = vmatpush1.bf16.msra.mxu0 0
        %506 = vmatprep.subr.bf16.mxu0 0
        %507 = vmatpush1.bf16.msra.mxu0 0
        %508 = vmatprep.subr.bf16.mxu0 0
        %509 = vmatpush1.bf16.msra.mxu0 0
        %510 = vmatprep.subr.bf16.mxu0 0
        %511 = vmatpush1.bf16.msra.mxu0 0
        %512 = vmatprep.subr.bf16.mxu0 0
        %513 = vmatpush1.bf16.msra.mxu0 %v455
        %514 = vmatprep.subr.bf16.mxu0 0
        %515 = vmatpush2.bf16.msra.mxu0 0
        %516 = vmatprep.subr.bf16.mxu0 0
        %517 = vmatpush2.bf16.msra.mxu0 0
        %518 = vmatprep.subr.bf16.mxu0 0
        %519 = vmatpush2.bf16.msra.mxu0 0
        %520 = vmatprep.subr.bf16.mxu0 0
        %521 = vmatpush2.bf16.msra.mxu0 0
        %522 = vmatprep.subr.bf16.mxu0 0
        %523 = vmatpush2.bf16.msra.mxu0 0
        %524 = vmatprep.subr.bf16.mxu0 0
        %525 = vmatpush2.bf16.msra.mxu0 0
        %526 = vmatprep.subr.bf16.mxu0 0
        %527 = vmatpush2.bf16.msra.mxu0 0
        %528 = vmatprep.subr.bf16.mxu0 0
        %529 = vmatpush2.bf16.msra.mxu0 0
        %530 = vmatprep.mubr.bf16.mxu0 0
        %531 = vmatmul.mubr.bf16.gmra.mxu0 %v446
        %v532 = vpop.f32.mrf.mxu0
        %v533 = vadd.f32 0.0, %v532
        %v534 = vpop.f32.mrf.mxu0
        %v535 = vpop.f32.mrf.mxu0
        %v536 = vpop.f32.mrf.mxu0
        %537 = vdwg.mxu0
        %v538 = vadd.f32 %v388, %v492
        %v539 = vadd.f32 %v390, %v494
        %v540 = vadd.f32 %v429, %v533
        %s541 = scalar_lea.vmem %s1, 12
        %v542 = vld [vmem:[%s541] sm:$0xf]
        %543 = vrot.lane.b32.xlu0 %v234, 110
        %v544 = vpop.permute.xlu0 %543
        %545 = vrot.lane.b32.xlu0 %v235, 110
        %v546 = vpop.permute.xlu0 %545
        %547 = vrot.lane.b32.xlu0 %v236, 110
        %v548 = vpop.permute.xlu0 %547
        %vm549 = vcmask 900096
        %v550 = vsel %vm549, %v544, %v546
        %v551 = vsel %vm549, %v546, %v548
        %v553 = vsel %vm246, %v542, 0
        %v556 = vsel %vm250, %v550, 0
        %v559 = vsel %vm250, %v551, 0
        %v562 = vsel %vm250, %v548, 0
        %564 = vmatprep.subr.bf16.mxu0 0
        %565 = vmatpush1.bf16.msra.mxu0 0
        %566 = vmatprep.subr.bf16.mxu0 0
        %567 = vmatpush1.bf16.msra.mxu0 0
        %568 = vmatprep.subr.bf16.mxu0 0
        %569 = vmatpush1.bf16.msra.mxu0 0
        %570 = vmatprep.subr.bf16.mxu0 0
        %571 = vmatpush1.bf16.msra.mxu0 0
        %572 = vmatprep.subr.bf16.mxu0 0
        %573 = vmatpush1.bf16.msra.mxu0 0
        %574 = vmatprep.subr.bf16.mxu0 0
        %575 = vmatpush1.bf16.msra.mxu0 0
        %576 = vmatprep.subr.bf16.mxu0 0
        %577 = vmatpush1.bf16.msra.mxu0 0
        %578 = vmatprep.subr.bf16.mxu0 %v559
        %579 = vmatpush1.bf16.msra.mxu0 %v556
        %580 = vmatprep.subr.bf16.mxu0 0
        %581 = vmatpush2.bf16.msra.mxu0 0
        %582 = vmatprep.subr.bf16.mxu0 0
        %583 = vmatpush2.bf16.msra.mxu0 0
        %584 = vmatprep.subr.bf16.mxu0 0
        %585 = vmatpush2.bf16.msra.mxu0 0
        %586 = vmatprep.subr.bf16.mxu0 0
        %587 = vmatpush2.bf16.msra.mxu0 0
        %588 = vmatprep.subr.bf16.mxu0 0
        %589 = vmatpush2.bf16.msra.mxu0 0
        %590 = vmatprep.subr.bf16.mxu0 0
        %591 = vmatpush2.bf16.msra.mxu0 0
        %592 = vmatprep.subr.bf16.mxu0 0
        %593 = vmatpush2.bf16.msra.mxu0 0
        %594 = vmatprep.subr.bf16.mxu0 0
        %595 = vmatpush2.bf16.msra.mxu0 0
        %596 = vmatprep.mubr.bf16.mxu0 0
        %597 = vmatmul.mubr.bf16.gmra.mxu0 %v553
        %v598 = vpop.f32.mrf.mxu0
        %v599 = vadd.f32 0.0, %v598
        %v600 = vpop.f32.mrf.mxu0
        %v601 = vadd.f32 0.0, %v600
        %v602 = vpop.f32.mrf.mxu0
        %v603 = vpop.f32.mrf.mxu0
        %604 = vdwg.mxu0
        %605 = vmatprep.subr.bf16.mxu0 0
        %606 = vmatpush1.bf16.msra.mxu0 0
        %607 = vmatprep.subr.bf16.mxu0 0
        %608 = vmatpush1.bf16.msra.mxu0 0
        %609 = vmatprep.subr.bf16.mxu0 0
        %610 = vmatpush1.bf16.msra.mxu0 0
        %611 = vmatprep.subr.bf16.mxu0 0
        %612 = vmatpush1.bf16.msra.mxu0 0
        %613 = vmatprep.subr.bf16.mxu0 0
        %614 = vmatpush1.bf16.msra.mxu0 0
        %615 = vmatprep.subr.bf16.mxu0 0
        %616 = vmatpush1.bf16.msra.mxu0 0
        %617 = vmatprep.subr.bf16.mxu0 0
        %618 = vmatpush1.bf16.msra.mxu0 0
        %619 = vmatprep.subr.bf16.mxu0 0
        %620 = vmatpush1.bf16.msra.mxu0 %v562
        %621 = vmatprep.subr.bf16.mxu0 0
        %622 = vmatpush2.bf16.msra.mxu0 0
        %623 = vmatprep.subr.bf16.mxu0 0
        %624 = vmatpush2.bf16.msra.mxu0 0
        %625 = vmatprep.subr.bf16.mxu0 0
        %626 = vmatpush2.bf16.msra.mxu0 0
        %627 = vmatprep.subr.bf16.mxu0 0
        %628 = vmatpush2.bf16.msra.mxu0 0
        %629 = vmatprep.subr.bf16.mxu0 0
        %630 = vmatpush2.bf16.msra.mxu0 0
        %631 = vmatprep.subr.bf16.mxu0 0
        %632 = vmatpush2.bf16.msra.mxu0 0
        %633 = vmatprep.subr.bf16.mxu0 0
        %634 = vmatpush2.bf16.msra.mxu0 0
        %635 = vmatprep.subr.bf16.mxu0 0
        %636 = vmatpush2.bf16.msra.mxu0 0
        %637 = vmatprep.mubr.bf16.mxu0 0
        %638 = vmatmul.mubr.bf16.gmra.mxu0 %v553
        %v639 = vpop.f32.mrf.mxu0
        %v640 = vadd.f32 0.0, %v639
        %v641 = vpop.f32.mrf.mxu0
        %v642 = vpop.f32.mrf.mxu0
        %v643 = vpop.f32.mrf.mxu0
        %644 = vdwg.mxu0
        %v645 = vadd.f32 %v538, %v599
        %v646 = vadd.f32 %v539, %v601
        %v647 = vadd.f32 %v540, %v640
        %s648 = scalar_lea.vmem %s1, 16
        %v649 = vld [vmem:[%s648] sm:$0xf]
        %650 = vrot.lane.b32.xlu0 %v234, 109
        %v651 = vpop.permute.xlu0 %650
        %652 = vrot.lane.b32.xlu0 %v235, 109
        %v653 = vpop.permute.xlu0 %652
        %654 = vrot.lane.b32.xlu0 %v236, 109
        %v655 = vpop.permute.xlu0 %654
        %vm656 = vcmask 891904
        %v657 = vsel %vm656, %v651, %v653
        %v658 = vsel %vm656, %v653, %v655
        %v660 = vsel %vm246, %v649, 0
        %v663 = vsel %vm250, %v657, 0
        %v666 = vsel %vm250, %v658, 0
        %v669 = vsel %vm250, %v655, 0
        %671 = vmatprep.subr.bf16.mxu0 0
        %672 = vmatpush1.bf16.msra.mxu0 0
        %673 = vmatprep.subr.bf16.mxu0 0
        %674 = vmatpush1.bf16.msra.mxu0 0
        %675 = vmatprep.subr.bf16.mxu0 0
        %676 = vmatpush1.bf16.msra.mxu0 0
        %677 = vmatprep.subr.bf16.mxu0 0
        %678 = vmatpush1.bf16.msra.mxu0 0
        %679 = vmatprep.subr.bf16.mxu0 0
        %680 = vmatpush1.bf16.msra.mxu0 0
        %681 = vmatprep.subr.bf16.mxu0 0
        %682 = vmatpush1.bf16.msra.mxu0 0
        %683 = vmatprep.subr.bf16.mxu0 0
        %684 = vmatpush1.bf16.msra.mxu0 0
        %685 = vmatprep.subr.bf16.mxu0 %v666
        %686 = vmatpush1.bf16.msra.mxu0 %v663
        %687 = vmatprep.subr.bf16.mxu0 0
        %688 = vmatpush2.bf16.msra.mxu0 0
        %689 = vmatprep.subr.bf16.mxu0 0
        %690 = vmatpush2.bf16.msra.mxu0 0
        %691 = vmatprep.subr.bf16.mxu0 0
        %692 = vmatpush2.bf16.msra.mxu0 0
        %693 = vmatprep.subr.bf16.mxu0 0
        %694 = vmatpush2.bf16.msra.mxu0 0
        %695 = vmatprep.subr.bf16.mxu0 0
        %696 = vmatpush2.bf16.msra.mxu0 0
        %697 = vmatprep.subr.bf16.mxu0 0
        %698 = vmatpush2.bf16.msra.mxu0 0
        %699 = vmatprep.subr.bf16.mxu0 0
        %700 = vmatpush2.bf16.msra.mxu0 0
        %701 = vmatprep.subr.bf16.mxu0 0
        %702 = vmatpush2.bf16.msra.mxu0 0
        %703 = vmatprep.mubr.bf16.mxu0 0
        %704 = vmatmul.mubr.bf16.gmra.mxu0 %v660
        %v705 = vpop.f32.mrf.mxu0
        %v706 = vadd.f32 0.0, %v705
        %v707 = vpop.f32.mrf.mxu0
        %v708 = vadd.f32 0.0, %v707
        %v709 = vpop.f32.mrf.mxu0
        %v710 = vpop.f32.mrf.mxu0
        %711 = vdwg.mxu0
        %712 = vmatprep.subr.bf16.mxu0 0
        %713 = vmatpush1.bf16.msra.mxu0 0
        %714 = vmatprep.subr.bf16.mxu0 0
        %715 = vmatpush1.bf16.msra.mxu0 0
        %716 = vmatprep.subr.bf16.mxu0 0
        %717 = vmatpush1.bf16.msra.mxu0 0
        %718 = vmatprep.subr.bf16.mxu0 0
        %719 = vmatpush1.bf16.msra.mxu0 0
        %720 = vmatprep.subr.bf16.mxu0 0
        %721 = vmatpush1.bf16.msra.mxu0 0
        %722 = vmatprep.subr.bf16.mxu0 0
        %723 = vmatpush1.bf16.msra.mxu0 0
        %724 = vmatprep.subr.bf16.mxu0 0
        %725 = vmatpush1.bf16.msra.mxu0 0
        %726 = vmatprep.subr.bf16.mxu0 0
        %727 = vmatpush1.bf16.msra.mxu0 %v669
        %728 = vmatprep.subr.bf16.mxu0 0
        %729 = vmatpush2.bf16.msra.mxu0 0
        %730 = vmatprep.subr.bf16.mxu0 0
        %731 = vmatpush2.bf16.msra.mxu0 0
        %732 = vmatprep.subr.bf16.mxu0 0
        %733 = vmatpush2.bf16.msra.mxu0 0
        %734 = vmatprep.subr.bf16.mxu0 0
        %735 = vmatpush2.bf16.msra.mxu0 0
        %736 = vmatprep.subr.bf16.mxu0 0
        %737 = vmatpush2.bf16.msra.mxu0 0
        %738 = vmatprep.subr.bf16.mxu0 0
        %739 = vmatpush2.bf16.msra.mxu0 0
        %740 = vmatprep.subr.bf16.mxu0 0
        %741 = vmatpush2.bf16.msra.mxu0 0
        %742 = vmatprep.subr.bf16.mxu0 0
        %743 = vmatpush2.bf16.msra.mxu0 0
        %744 = vmatprep.mubr.bf16.mxu0 0
        %745 = vmatmul.mubr.bf16.gmra.mxu0 %v660
        %v746 = vpop.f32.mrf.mxu0
        %v747 = vadd.f32 0.0, %v746
        %v748 = vpop.f32.mrf.mxu0
        %v749 = vpop.f32.mrf.mxu0
        %v750 = vpop.f32.mrf.mxu0
        %751 = vdwg.mxu0
        %v752 = vadd.f32 %v645, %v706
        %v753 = vadd.f32 %v646, %v708
        %v754 = vadd.f32 %v647, %v747
        %s755 = scalar_lea.vmem %s1, 20
        %v756 = vld [vmem:[%s755] sm:$0xf]
        %757 = vrot.lane.b32.xlu0 %v234, 108
        %v758 = vpop.permute.xlu0 %757
        %759 = vrot.lane.b32.xlu0 %v235, 108
        %v760 = vpop.permute.xlu0 %759
        %761 = vrot.lane.b32.xlu0 %v236, 108
        %v762 = vpop.permute.xlu0 %761
        %vm763 = vcmask 883712
        %v764 = vsel %vm763, %v758, %v760
        %v765 = vsel %vm763, %v760, %v762
        %v767 = vsel %vm246, %v756, 0
        %v770 = vsel %vm250, %v764, 0
        %v773 = vsel %vm250, %v765, 0
        %v776 = vsel %vm250, %v762, 0
        %778 = vmatprep.subr.bf16.mxu0 0
        %779 = vmatpush1.bf16.msra.mxu0 0
        %780 = vmatprep.subr.bf16.mxu0 0
        %781 = vmatpush1.bf16.msra.mxu0 0
        %782 = vmatprep.subr.bf16.mxu0 0
        %783 = vmatpush1.bf16.msra.mxu0 0
        %784 = vmatprep.subr.bf16.mxu0 0
        %785 = vmatpush1.bf16.msra.mxu0 0
        %786 = vmatprep.subr.bf16.mxu0 0
        %787 = vmatpush1.bf16.msra.mxu0 0
        %788 = vmatprep.subr.bf16.mxu0 0
        %789 = vmatpush1.bf16.msra.mxu0 0
        %790 = vmatprep.subr.bf16.mxu0 0
        %791 = vmatpush1.bf16.msra.mxu0 0
        %792 = vmatprep.subr.bf16.mxu0 %v773
        %793 = vmatpush1.bf16.msra.mxu0 %v770
        %794 = vmatprep.subr.bf16.mxu0 0
        %795 = vmatpush2.bf16.msra.mxu0 0
        %796 = vmatprep.subr.bf16.mxu0 0
        %797 = vmatpush2.bf16.msra.mxu0 0
        %798 = vmatprep.subr.bf16.mxu0 0
        %799 = vmatpush2.bf16.msra.mxu0 0
        %800 = vmatprep.subr.bf16.mxu0 0
        %801 = vmatpush2.bf16.msra.mxu0 0
        %802 = vmatprep.subr.bf16.mxu0 0
        %803 = vmatpush2.bf16.msra.mxu0 0
        %804 = vmatprep.subr.bf16.mxu0 0
        %805 = vmatpush2.bf16.msra.mxu0 0
        %806 = vmatprep.subr.bf16.mxu0 0
        %807 = vmatpush2.bf16.msra.mxu0 0
        %808 = vmatprep.subr.bf16.mxu0 0
        %809 = vmatpush2.bf16.msra.mxu0 0
        %810 = vmatprep.mubr.bf16.mxu0 0
        %811 = vmatmul.mubr.bf16.gmra.mxu0 %v767
        %v812 = vpop.f32.mrf.mxu0
        %v813 = vadd.f32 0.0, %v812
        %v814 = vpop.f32.mrf.mxu0
        %v815 = vadd.f32 0.0, %v814
        %v816 = vpop.f32.mrf.mxu0
        %v817 = vpop.f32.mrf.mxu0
        %818 = vdwg.mxu0
        %819 = vmatprep.subr.bf16.mxu0 0
        %820 = vmatpush1.bf16.msra.mxu0 0
        %821 = vmatprep.subr.bf16.mxu0 0
        %822 = vmatpush1.bf16.msra.mxu0 0
        %823 = vmatprep.subr.bf16.mxu0 0
        %824 = vmatpush1.bf16.msra.mxu0 0
        %825 = vmatprep.subr.bf16.mxu0 0
        %826 = vmatpush1.bf16.msra.mxu0 0
        %827 = vmatprep.subr.bf16.mxu0 0
        %828 = vmatpush1.bf16.msra.mxu0 0
        %829 = vmatprep.subr.bf16.mxu0 0
        %830 = vmatpush1.bf16.msra.mxu0 0
        %831 = vmatprep.subr.bf16.mxu0 0
        %832 = vmatpush1.bf16.msra.mxu0 0
        %833 = vmatprep.subr.bf16.mxu0 0
        %834 = vmatpush1.bf16.msra.mxu0 %v776
        %835 = vmatprep.subr.bf16.mxu0 0
        %836 = vmatpush2.bf16.msra.mxu0 0
        %837 = vmatprep.subr.bf16.mxu0 0
        %838 = vmatpush2.bf16.msra.mxu0 0
        %839 = vmatprep.subr.bf16.mxu0 0
        %840 = vmatpush2.bf16.msra.mxu0 0
        %841 = vmatprep.subr.bf16.mxu0 0
        %842 = vmatpush2.bf16.msra.mxu0 0
        %843 = vmatprep.subr.bf16.mxu0 0
        %844 = vmatpush2.bf16.msra.mxu0 0
        %845 = vmatprep.subr.bf16.mxu0 0
        %846 = vmatpush2.bf16.msra.mxu0 0
        %847 = vmatprep.subr.bf16.mxu0 0
        %848 = vmatpush2.bf16.msra.mxu0 0
        %849 = vmatprep.subr.bf16.mxu0 0
        %850 = vmatpush2.bf16.msra.mxu0 0
        %851 = vmatprep.mubr.bf16.mxu0 0
        %852 = vmatmul.mubr.bf16.gmra.mxu0 %v767
        %v853 = vpop.f32.mrf.mxu0
        %v854 = vadd.f32 0.0, %v853
        %v855 = vpop.f32.mrf.mxu0
        %v856 = vpop.f32.mrf.mxu0
        %v857 = vpop.f32.mrf.mxu0
        %858 = vdwg.mxu0
        %v859 = vadd.f32 %v752, %v813
        %v860 = vadd.f32 %v753, %v815
        %v861 = vadd.f32 %v754, %v854
        %s862 = scalar_lea.vmem %s1, 24
        %v863 = vld [vmem:[%s862] sm:$0xf]
        %v864 = vunpack.c.h.b16 %v225
        %v865 = vpack.c.b16 %v864, %v864
        %866 = vrot.lane.b32.xlu0 %v234, 92
        %v867 = vpop.permute.xlu0 %866
        %868 = vrot.lane.b32.xlu0 %v235, 92
        %v869 = vpop.permute.xlu0 %868
        %870 = vrot.lane.b32.xlu0 %v236, 92
        %v871 = vpop.permute.xlu0 %870
        %872 = vrot.lane.b32.xlu0 %v865, 92
        %v873 = vpop.permute.xlu0 %872
        %vm874 = vcmask 752640
        %v875 = vsel %vm874, %v867, %v869
        %v876 = vsel %vm874, %v869, %v871
        %v877 = vsel %vm874, %v871, %v873
        %v879 = vsel %vm246, %v863, 0
        %v882 = vsel %vm250, %v875, 0
        %v885 = vsel %vm250, %v876, 0
        %v888 = vsel %vm250, %v877, 0
        %890 = vmatprep.subr.bf16.mxu0 0
        %891 = vmatpush1.bf16.msra.mxu0 0
        %892 = vmatprep.subr.bf16.mxu0 0
        %893 = vmatpush1.bf16.msra.mxu0 0
        %894 = vmatprep.subr.bf16.mxu0 0
        %895 = vmatpush1.bf16.msra.mxu0 0
        %896 = vmatprep.subr.bf16.mxu0 0
        %897 = vmatpush1.bf16.msra.mxu0 0
        %898 = vmatprep.subr.bf16.mxu0 0
        %899 = vmatpush1.bf16.msra.mxu0 0
        %900 = vmatprep.subr.bf16.mxu0 0
        %901 = vmatpush1.bf16.msra.mxu0 0
        %902 = vmatprep.subr.bf16.mxu0 0
        %903 = vmatpush1.bf16.msra.mxu0 0
        %904 = vmatprep.subr.bf16.mxu0 %v885
        %905 = vmatpush1.bf16.msra.mxu0 %v882
        %906 = vmatprep.subr.bf16.mxu0 0
        %907 = vmatpush2.bf16.msra.mxu0 0
        %908 = vmatprep.subr.bf16.mxu0 0
        %909 = vmatpush2.bf16.msra.mxu0 0
        %910 = vmatprep.subr.bf16.mxu0 0
        %911 = vmatpush2.bf16.msra.mxu0 0
        %912 = vmatprep.subr.bf16.mxu0 0
        %913 = vmatpush2.bf16.msra.mxu0 0
        %914 = vmatprep.subr.bf16.mxu0 0
        %915 = vmatpush2.bf16.msra.mxu0 0
        %916 = vmatprep.subr.bf16.mxu0 0
        %917 = vmatpush2.bf16.msra.mxu0 0
        %918 = vmatprep.subr.bf16.mxu0 0
        %919 = vmatpush2.bf16.msra.mxu0 0
        %920 = vmatprep.subr.bf16.mxu0 0
        %921 = vmatpush2.bf16.msra.mxu0 0
        %922 = vmatprep.mubr.bf16.mxu0 0
        %923 = vmatmul.mubr.bf16.gmra.mxu0 %v879
        %v924 = vpop.f32.mrf.mxu0
        %v925 = vadd.f32 0.0, %v924
        %v926 = vpop.f32.mrf.mxu0
        %v927 = vadd.f32 0.0, %v926
        %v928 = vpop.f32.mrf.mxu0
        %v929 = vpop.f32.mrf.mxu0
        %930 = vdwg.mxu0
        %931 = vmatprep.subr.bf16.mxu0 0
        %932 = vmatpush1.bf16.msra.mxu0 0
        %933 = vmatprep.subr.bf16.mxu0 0
        %934 = vmatpush1.bf16.msra.mxu0 0
        %935 = vmatprep.subr.bf16.mxu0 0
        %936 = vmatpush1.bf16.msra.mxu0 0
        %937 = vmatprep.subr.bf16.mxu0 0
        %938 = vmatpush1.bf16.msra.mxu0 0
        %939 = vmatprep.subr.bf16.mxu0 0
        %940 = vmatpush1.bf16.msra.mxu0 0
        %941 = vmatprep.subr.bf16.mxu0 0
        %942 = vmatpush1.bf16.msra.mxu0 0
        %943 = vmatprep.subr.bf16.mxu0 0
        %944 = vmatpush1.bf16.msra.mxu0 0
        %945 = vmatprep.subr.bf16.mxu0 0
        %946 = vmatpush1.bf16.msra.mxu0 %v888
        %947 = vmatprep.subr.bf16.mxu0 0
        %948 = vmatpush2.bf16.msra.mxu0 0
        %949 = vmatprep.subr.bf16.mxu0 0
        %950 = vmatpush2.bf16.msra.mxu0 0
        %951 = vmatprep.subr.bf16.mxu0 0
        %952 = vmatpush2.bf16.msra.mxu0 0
        %953 = vmatprep.subr.bf16.mxu0 0
        %954 = vmatpush2.bf16.msra.mxu0 0
        %955 = vmatprep.subr.bf16.mxu0 0
        %956 = vmatpush2.bf16.msra.mxu0 0
        %957 = vmatprep.subr.bf16.mxu0 0
        %958 = vmatpush2.bf16.msra.mxu0 0
        %959 = vmatprep.subr.bf16.mxu0 0
        %960 = vmatpush2.bf16.msra.mxu0 0
        %961 = vmatprep.subr.bf16.mxu0 0
        %962 = vmatpush2.bf16.msra.mxu0 0
        %963 = vmatprep.mubr.bf16.mxu0 0
        %964 = vmatmul.mubr.bf16.gmra.mxu0 %v879
        %v965 = vpop.f32.mrf.mxu0
        %v966 = vadd.f32 0.0, %v965
        %v967 = vpop.f32.mrf.mxu0
        %v968 = vpop.f32.mrf.mxu0
        %v969 = vpop.f32.mrf.mxu0
        %970 = vdwg.mxu0
        %v971 = vadd.f32 %v859, %v925
        %v972 = vadd.f32 %v860, %v927
        %v973 = vadd.f32 %v861, %v966
        %s974 = scalar_lea.vmem %s1, 28
        %v975 = vld [vmem:[%s974] sm:$0xf]
        %976 = vrot.lane.b32.xlu0 %v234, 91
        %v977 = vpop.permute.xlu0 %976
        %978 = vrot.lane.b32.xlu0 %v235, 91
        %v979 = vpop.permute.xlu0 %978
        %980 = vrot.lane.b32.xlu0 %v236, 91
        %v981 = vpop.permute.xlu0 %980
        %982 = vrot.lane.b32.xlu0 %v865, 91
        %v983 = vpop.permute.xlu0 %982
        %vm984 = vcmask 744448
        %v985 = vsel %vm984, %v977, %v979
        %v986 = vsel %vm984, %v979, %v981
        %v987 = vsel %vm984, %v981, %v983
        %v989 = vsel %vm246, %v975, 0
        %v992 = vsel %vm250, %v985, 0
        %v995 = vsel %vm250, %v986, 0
        %v998 = vsel %vm250, %v987, 0
        %1000 = vmatprep.subr.bf16.mxu0 0
        %1001 = vmatpush1.bf16.msra.mxu0 0
        %1002 = vmatprep.subr.bf16.mxu0 0
        %1003 = vmatpush1.bf16.msra.mxu0 0
        %1004 = vmatprep.subr.bf16.mxu0 0
        %1005 = vmatpush1.bf16.msra.mxu0 0
        %1006 = vmatprep.subr.bf16.mxu0 0
        %1007 = vmatpush1.bf16.msra.mxu0 0
        %1008 = vmatprep.subr.bf16.mxu0 0
        %1009 = vmatpush1.bf16.msra.mxu0 0
        %1010 = vmatprep.subr.bf16.mxu0 0
        %1011 = vmatpush1.bf16.msra.mxu0 0
        %1012 = vmatprep.subr.bf16.mxu0 0
        %1013 = vmatpush1.bf16.msra.mxu0 0
        %1014 = vmatprep.subr.bf16.mxu0 %v995
        %1015 = vmatpush1.bf16.msra.mxu0 %v992
        %1016 = vmatprep.subr.bf16.mxu0 0
        %1017 = vmatpush2.bf16.msra.mxu0 0
        %1018 = vmatprep.subr.bf16.mxu0 0
        %1019 = vmatpush2.bf16.msra.mxu0 0
        %1020 = vmatprep.subr.bf16.mxu0 0
        %1021 = vmatpush2.bf16.msra.mxu0 0
        %1022 = vmatprep.subr.bf16.mxu0 0
        %1023 = vmatpush2.bf16.msra.mxu0 0
        %1024 = vmatprep.subr.bf16.mxu0 0
        %1025 = vmatpush2.bf16.msra.mxu0 0
        %1026 = vmatprep.subr.bf16.mxu0 0
        %1027 = vmatpush2.bf16.msra.mxu0 0
        %1028 = vmatprep.subr.bf16.mxu0 0
        %1029 = vmatpush2.bf16.msra.mxu0 0
        %1030 = vmatprep.subr.bf16.mxu0 0
        %1031 = vmatpush2.bf16.msra.mxu0 0
        %1032 = vmatprep.mubr.bf16.mxu0 0
        %1033 = vmatmul.mubr.bf16.gmra.mxu0 %v989
        %v1034 = vpop.f32.mrf.mxu0
        %v1035 = vadd.f32 0.0, %v1034
        %v1036 = vpop.f32.mrf.mxu0
        %v1037 = vadd.f32 0.0, %v1036
        %v1038 = vpop.f32.mrf.mxu0
        %v1039 = vpop.f32.mrf.mxu0
        %1040 = vdwg.mxu0
        %1041 = vmatprep.subr.bf16.mxu0 0
        %1042 = vmatpush1.bf16.msra.mxu0 0
        %1043 = vmatprep.subr.bf16.mxu0 0
        %1044 = vmatpush1.bf16.msra.mxu0 0
        %1045 = vmatprep.subr.bf16.mxu0 0
        %1046 = vmatpush1.bf16.msra.mxu0 0
        %1047 = vmatprep.subr.bf16.mxu0 0
        %1048 = vmatpush1.bf16.msra.mxu0 0
        %1049 = vmatprep.subr.bf16.mxu0 0
        %1050 = vmatpush1.bf16.msra.mxu0 0
        %1051 = vmatprep.subr.bf16.mxu0 0
        %1052 = vmatpush1.bf16.msra.mxu0 0
        %1053 = vmatprep.subr.bf16.mxu0 0
        %1054 = vmatpush1.bf16.msra.mxu0 0
        %1055 = vmatprep.subr.bf16.mxu0 0
        %1056 = vmatpush1.bf16.msra.mxu0 %v998
        %1057 = vmatprep.subr.bf16.mxu0 0
        %1058 = vmatpush2.bf16.msra.mxu0 0
        %1059 = vmatprep.subr.bf16.mxu0 0
        %1060 = vmatpush2.bf16.msra.mxu0 0
        %1061 = vmatprep.subr.bf16.mxu0 0
        %1062 = vmatpush2.bf16.msra.mxu0 0
        %1063 = vmatprep.subr.bf16.mxu0 0
        %1064 = vmatpush2.bf16.msra.mxu0 0
        %1065 = vmatprep.subr.bf16.mxu0 0
        %1066 = vmatpush2.bf16.msra.mxu0 0
        %1067 = vmatprep.subr.bf16.mxu0 0
        %1068 = vmatpush2.bf16.msra.mxu0 0
        %1069 = vmatprep.subr.bf16.mxu0 0
        %1070 = vmatpush2.bf16.msra.mxu0 0
        %1071 = vmatprep.subr.bf16.mxu0 0
        %1072 = vmatpush2.bf16.msra.mxu0 0
        %1073 = vmatprep.mubr.bf16.mxu0 0
        %1074 = vmatmul.mubr.bf16.gmra.mxu0 %v989
        %v1075 = vpop.f32.mrf.mxu0
        %v1076 = vadd.f32 0.0, %v1075
        %v1077 = vpop.f32.mrf.mxu0
        %v1078 = vpop.f32.mrf.mxu0
        %v1079 = vpop.f32.mrf.mxu0
        %1080 = vdwg.mxu0
        %v1081 = vadd.f32 %v971, %v1035
        %v1082 = vadd.f32 %v972, %v1037
        %v1083 = vadd.f32 %v973, %v1076
        %s1084 = scalar_lea.vmem %s1, 32
        %v1085 = vld [vmem:[%s1084] sm:$0xf]
        %1086 = vrot.lane.b32.xlu0 %v234, 90
        %v1087 = vpop.permute.xlu0 %1086
        %1088 = vrot.lane.b32.xlu0 %v235, 90
        %v1089 = vpop.permute.xlu0 %1088
        %1090 = vrot.lane.b32.xlu0 %v236, 90
        %v1091 = vpop.permute.xlu0 %1090
        %1092 = vrot.lane.b32.xlu0 %v865, 90
        %v1093 = vpop.permute.xlu0 %1092
        %vm1094 = vcmask 736256
        %v1095 = vsel %vm1094, %v1087, %v1089
        %v1096 = vsel %vm1094, %v1089, %v1091
        %v1097 = vsel %vm1094, %v1091, %v1093
        %v1099 = vsel %vm246, %v1085, 0
        %v1102 = vsel %vm250, %v1095, 0
        %v1105 = vsel %vm250, %v1096, 0
        %v1108 = vsel %vm250, %v1097, 0
        %1110 = vmatprep.subr.bf16.mxu0 0
        %1111 = vmatpush1.bf16.msra.mxu0 0
        %1112 = vmatprep.subr.bf16.mxu0 0
        %1113 = vmatpush1.bf16.msra.mxu0 0
        %1114 = vmatprep.subr.bf16.mxu0 0
        %1115 = vmatpush1.bf16.msra.mxu0 0
        %1116 = vmatprep.subr.bf16.mxu0 0
        %1117 = vmatpush1.bf16.msra.mxu0 0
        %1118 = vmatprep.subr.bf16.mxu0 0
        %1119 = vmatpush1.bf16.msra.mxu0 0
        %1120 = vmatprep.subr.bf16.mxu0 0
        %1121 = vmatpush1.bf16.msra.mxu0 0
        %1122 = vmatprep.subr.bf16.mxu0 0
        %1123 = vmatpush1.bf16.msra.mxu0 0
        %1124 = vmatprep.subr.bf16.mxu0 %v1105
        %1125 = vmatpush1.bf16.msra.mxu0 %v1102
        %1126 = vmatprep.subr.bf16.mxu0 0
        %1127 = vmatpush2.bf16.msra.mxu0 0
        %1128 = vmatprep.subr.bf16.mxu0 0
        %1129 = vmatpush2.bf16.msra.mxu0 0
        %1130 = vmatprep.subr.bf16.mxu0 0
        %1131 = vmatpush2.bf16.msra.mxu0 0
        %1132 = vmatprep.subr.bf16.mxu0 0
        %1133 = vmatpush2.bf16.msra.mxu0 0
        %1134 = vmatprep.subr.bf16.mxu0 0
        %1135 = vmatpush2.bf16.msra.mxu0 0
        %1136 = vmatprep.subr.bf16.mxu0 0
        %1137 = vmatpush2.bf16.msra.mxu0 0
        %1138 = vmatprep.subr.bf16.mxu0 0
        %1139 = vmatpush2.bf16.msra.mxu0 0
        %1140 = vmatprep.subr.bf16.mxu0 0
        %1141 = vmatpush2.bf16.msra.mxu0 0
        %1142 = vmatprep.mubr.bf16.mxu0 0
        %1143 = vmatmul.mubr.bf16.gmra.mxu0 %v1099
        %v1144 = vpop.f32.mrf.mxu0
        %v1145 = vadd.f32 0.0, %v1144
        %v1146 = vpop.f32.mrf.mxu0
        %v1147 = vadd.f32 0.0, %v1146
        %v1148 = vpop.f32.mrf.mxu0
        %v1149 = vpop.f32.mrf.mxu0
        %1150 = vdwg.mxu0
        %1151 = vmatprep.subr.bf16.mxu0 0
        %1152 = vmatpush1.bf16.msra.mxu0 0
        %1153 = vmatprep.subr.bf16.mxu0 0
        %1154 = vmatpush1.bf16.msra.mxu0 0
        %1155 = vmatprep.subr.bf16.mxu0 0
        %1156 = vmatpush1.bf16.msra.mxu0 0
        %1157 = vmatprep.subr.bf16.mxu0 0
        %1158 = vmatpush1.bf16.msra.mxu0 0
        %1159 = vmatprep.subr.bf16.mxu0 0
        %1160 = vmatpush1.bf16.msra.mxu0 0
        %1161 = vmatprep.subr.bf16.mxu0 0
        %1162 = vmatpush1.bf16.msra.mxu0 0
        %1163 = vmatprep.subr.bf16.mxu0 0
        %1164 = vmatpush1.bf16.msra.mxu0 0
        %1165 = vmatprep.subr.bf16.mxu0 0
        %1166 = vmatpush1.bf16.msra.mxu0 %v1108
        %1167 = vmatprep.subr.bf16.mxu0 0
        %1168 = vmatpush2.bf16.msra.mxu0 0
        %1169 = vmatprep.subr.bf16.mxu0 0
        %1170 = vmatpush2.bf16.msra.mxu0 0
        %1171 = vmatprep.subr.bf16.mxu0 0
        %1172 = vmatpush2.bf16.msra.mxu0 0
        %1173 = vmatprep.subr.bf16.mxu0 0
        %1174 = vmatpush2.bf16.msra.mxu0 0
        %1175 = vmatprep.subr.bf16.mxu0 0
        %1176 = vmatpush2.bf16.msra.mxu0 0
        %1177 = vmatprep.subr.bf16.mxu0 0
        %1178 = vmatpush2.bf16.msra.mxu0 0
        %1179 = vmatprep.subr.bf16.mxu0 0
        %1180 = vmatpush2.bf16.msra.mxu0 0
        %1181 = vmatprep.subr.bf16.mxu0 0
        %1182 = vmatpush2.bf16.msra.mxu0 0
        %1183 = vmatprep.mubr.bf16.mxu0 0
        %1184 = vmatmul.mubr.bf16.gmra.mxu0 %v1099
        %v1185 = vpop.f32.mrf.mxu0
        %v1186 = vadd.f32 0.0, %v1185
        %v1187 = vpop.f32.mrf.mxu0
        %v1188 = vpop.f32.mrf.mxu0
        %v1189 = vpop.f32.mrf.mxu0
        %1190 = vdwg.mxu0
        %v1191 = vadd.f32 %v1081, %v1145
        %v1192 = vadd.f32 %v1082, %v1147
        %v1193 = vadd.f32 %v1083, %v1186
        %v1194 = vld [vmem:[%s2] sm:$0xff]
        %1196 = vset.pattern.permute.xlu0 0
        %1197 = vperm.xlu0 %1196, %v1194
        %v1198 = vpop.permute.xlu0 %1197
        %v1200 = vadd.f32 %v1191, %v1198
        %v1201 = vadd.f32 %v1192, %v1198
        %v1202 = vadd.f32 %v1193, %v1198
        %v1203 = vmax.f32 %v1200, 0.0
        %v1204 = vmax.f32 %v1201, 0.0
        %v1205 = vmax.f32 %v1202, 0.0
        %v1206 = vld [vmem:[%s4] sm:$0x7]
        %v1208 = vlaneseq
        %v1209 = vshrl.u32 %v1208, 7
        %v1210 = vsub.s32 0, %v1209
        %v1211 = vrot.slane %v1206, %v1210
        %v1212 = vlaneseq
        %v1213 = vshrl.u32 %v1212, 7
        %v1214 = vsub.s32 1, %v1213
        %v1215 = vrot.slane %v1206, %v1214
        %v1216 = vlaneseq
        %v1217 = vshrl.u32 %v1216, 7
        %v1218 = vsub.s32 2, %v1217
        %v1219 = vrot.slane %v1206, %v1218
        %v1223 = vmul.f32 %v1203, %v1211
        %v1224 = vmul.f32 %v1204, %v1215
        %v1225 = vmul.f32 %v1205, %v1219
        %v1226 = vpack.c.bf16 %v1223, %v1223
        %v1227 = vpack.c.bf16 %v1224, %v1224
        %v1228 = vpack.c.bf16 %v1225, %v1225
        %v1229 = vld [vmem:[%s3] sm:$0xf]
        %s1230 = scalar_lea.vmem %s3, 4
        %v1231 = vld [vmem:[%s1230] sm:$0xf]
        %1235 = vrot.lane.b32.xlu0 %v1226, 127
        %v1236 = vpop.permute.xlu0 %1235
        %1237 = vrot.lane.b32.xlu0 %v1227, 127
        %v1238 = vpop.permute.xlu0 %1237
        %1239 = vrot.lane.b32.xlu0 %v1228, 127
        %v1240 = vpop.permute.xlu0 %1239
        %v1241 = vsel %vm243, %v1236, %v1238
        %v1242 = vsel %vm243, %v1238, %v1240
        %v1244 = vsel %vm246, %v1231, 0
        %v1247 = vsel %vm250, %v1241, 0
        %v1250 = vsel %vm250, %v1242, 0
        %v1253 = vsel %vm250, %v1240, 0
        %1255 = vmatprep.subr.bf16.mxu0 0
        %1256 = vmatpush1.bf16.msra.mxu0 0
        %1257 = vmatprep.subr.bf16.mxu0 0
        %1258 = vmatpush1.bf16.msra.mxu0 0
        %1259 = vmatprep.subr.bf16.mxu0 0
        %1260 = vmatpush1.bf16.msra.mxu0 0
        %1261 = vmatprep.subr.bf16.mxu0 0
        %1262 = vmatpush1.bf16.msra.mxu0 0
        %1263 = vmatprep.subr.bf16.mxu0 0
        %1264 = vmatpush1.bf16.msra.mxu0 0
        %1265 = vmatprep.subr.bf16.mxu0 0
        %1266 = vmatpush1.bf16.msra.mxu0 0
        %1267 = vmatprep.subr.bf16.mxu0 0
        %1268 = vmatpush1.bf16.msra.mxu0 0
        %1269 = vmatprep.subr.bf16.mxu0 %v1250
        %1270 = vmatpush1.bf16.msra.mxu0 %v1247
        %1271 = vmatprep.subr.bf16.mxu0 0
        %1272 = vmatpush2.bf16.msra.mxu0 0
        %1273 = vmatprep.subr.bf16.mxu0 0
        %1274 = vmatpush2.bf16.msra.mxu0 0
        %1275 = vmatprep.subr.bf16.mxu0 0
        %1276 = vmatpush2.bf16.msra.mxu0 0
        %1277 = vmatprep.subr.bf16.mxu0 0
        %1278 = vmatpush2.bf16.msra.mxu0 0
        %1279 = vmatprep.subr.bf16.mxu0 0
        %1280 = vmatpush2.bf16.msra.mxu0 0
        %1281 = vmatprep.subr.bf16.mxu0 0
        %1282 = vmatpush2.bf16.msra.mxu0 0
        %1283 = vmatprep.subr.bf16.mxu0 0
        %1284 = vmatpush2.bf16.msra.mxu0 0
        %1285 = vmatprep.subr.bf16.mxu0 0
        %1286 = vmatpush2.bf16.msra.mxu0 0
        %1287 = vmatprep.mubr.bf16.mxu0 0
        %1288 = vmatmul.mubr.bf16.gmra.mxu0 %v1244
        %v1289 = vpop.f32.mrf.mxu0
        %v1290 = vadd.f32 0.0, %v1289
        %v1291 = vpop.f32.mrf.mxu0
        %v1292 = vadd.f32 0.0, %v1291
        %v1293 = vpop.f32.mrf.mxu0
        %v1294 = vpop.f32.mrf.mxu0
        %1295 = vdwg.mxu0
        %1296 = vmatprep.subr.bf16.mxu0 0
        %1297 = vmatpush1.bf16.msra.mxu0 0
        %1298 = vmatprep.subr.bf16.mxu0 0
        %1299 = vmatpush1.bf16.msra.mxu0 0
        %1300 = vmatprep.subr.bf16.mxu0 0
        %1301 = vmatpush1.bf16.msra.mxu0 0
        %1302 = vmatprep.subr.bf16.mxu0 0
        %1303 = vmatpush1.bf16.msra.mxu0 0
        %1304 = vmatprep.subr.bf16.mxu0 0
        %1305 = vmatpush1.bf16.msra.mxu0 0
        %1306 = vmatprep.subr.bf16.mxu0 0
        %1307 = vmatpush1.bf16.msra.mxu0 0
        %1308 = vmatprep.subr.bf16.mxu0 0
        %1309 = vmatpush1.bf16.msra.mxu0 0
        %1310 = vmatprep.subr.bf16.mxu0 0
        %1311 = vmatpush1.bf16.msra.mxu0 %v1253
        %1312 = vmatprep.subr.bf16.mxu0 0
        %1313 = vmatpush2.bf16.msra.mxu0 0
        %1314 = vmatprep.subr.bf16.mxu0 0
        %1315 = vmatpush2.bf16.msra.mxu0 0
        %1316 = vmatprep.subr.bf16.mxu0 0
        %1317 = vmatpush2.bf16.msra.mxu0 0
        %1318 = vmatprep.subr.bf16.mxu0 0
        %1319 = vmatpush2.bf16.msra.mxu0 0
        %1320 = vmatprep.subr.bf16.mxu0 0
        %1321 = vmatpush2.bf16.msra.mxu0 0
        %1322 = vmatprep.subr.bf16.mxu0 0
        %1323 = vmatpush2.bf16.msra.mxu0 0
        %1324 = vmatprep.subr.bf16.mxu0 0
        %1325 = vmatpush2.bf16.msra.mxu0 0
        %1326 = vmatprep.subr.bf16.mxu0 0
        %1327 = vmatpush2.bf16.msra.mxu0 0
        %1328 = vmatprep.mubr.bf16.mxu0 0
        %1329 = vmatmul.mubr.bf16.gmra.mxu0 %v1244
        %v1330 = vpop.f32.mrf.mxu0
        %v1331 = vadd.f32 0.0, %v1330
        %v1332 = vpop.f32.mrf.mxu0
        %v1333 = vpop.f32.mrf.mxu0
        %v1334 = vpop.f32.mrf.mxu0
        %1335 = vdwg.mxu0
        %v1337 = vsel %vm246, %v1229, 0
        %v1340 = vsel %vm250, %v1226, 0
        %v1343 = vsel %vm250, %v1227, 0
        %v1346 = vsel %vm250, %v1228, 0
        %1348 = vmatprep.subr.bf16.mxu0 0
        %1349 = vmatpush1.bf16.msra.mxu0 0
        %1350 = vmatprep.subr.bf16.mxu0 0
        %1351 = vmatpush1.bf16.msra.mxu0 0
        %1352 = vmatprep.subr.bf16.mxu0 0
        %1353 = vmatpush1.bf16.msra.mxu0 0
        %1354 = vmatprep.subr.bf16.mxu0 0
        %1355 = vmatpush1.bf16.msra.mxu0 0
        %1356 = vmatprep.subr.bf16.mxu0 0
        %1357 = vmatpush1.bf16.msra.mxu0 0
        %1358 = vmatprep.subr.bf16.mxu0 0
        %1359 = vmatpush1.bf16.msra.mxu0 0
        %1360 = vmatprep.subr.bf16.mxu0 0
        %1361 = vmatpush1.bf16.msra.mxu0 0
        %1362 = vmatprep.subr.bf16.mxu0 %v1343
        %1363 = vmatpush1.bf16.msra.mxu0 %v1340
        %1364 = vmatprep.subr.bf16.mxu0 0
        %1365 = vmatpush2.bf16.msra.mxu0 0
        %1366 = vmatprep.subr.bf16.mxu0 0
        %1367 = vmatpush2.bf16.msra.mxu0 0
        %1368 = vmatprep.subr.bf16.mxu0 0
        %1369 = vmatpush2.bf16.msra.mxu0 0
        %1370 = vmatprep.subr.bf16.mxu0 0
        %1371 = vmatpush2.bf16.msra.mxu0 0
        %1372 = vmatprep.subr.bf16.mxu0 0
        %1373 = vmatpush2.bf16.msra.mxu0 0
        %1374 = vmatprep.subr.bf16.mxu0 0
        %1375 = vmatpush2.bf16.msra.mxu0 0
        %1376 = vmatprep.subr.bf16.mxu0 0
        %1377 = vmatpush2.bf16.msra.mxu0 0
        %1378 = vmatprep.subr.bf16.mxu0 0
        %1379 = vmatpush2.bf16.msra.mxu0 0
        %1380 = vmatprep.mubr.bf16.mxu0 0
        %1381 = vmatmul.mubr.bf16.gmra.mxu0 %v1337
        %v1382 = vpop.f32.mrf.mxu0
        %v1383 = vadd.f32 %v1290, %v1382
        %v1384 = vpop.f32.mrf.mxu0
        %v1385 = vadd.f32 %v1292, %v1384
        %v1386 = vpop.f32.mrf.mxu0
        %v1387 = vpop.f32.mrf.mxu0
        %1388 = vdwg.mxu0
        %1389 = vmatprep.subr.bf16.mxu0 0
        %1390 = vmatpush1.bf16.msra.mxu0 0
        %1391 = vmatprep.subr.bf16.mxu0 0
        %1392 = vmatpush1.bf16.msra.mxu0 0
        %1393 = vmatprep.subr.bf16.mxu0 0
        %1394 = vmatpush1.bf16.msra.mxu0 0
        %1395 = vmatprep.subr.bf16.mxu0 0
        %1396 = vmatpush1.bf16.msra.mxu0 0
        %1397 = vmatprep.subr.bf16.mxu0 0
        %1398 = vmatpush1.bf16.msra.mxu0 0
        %1399 = vmatprep.subr.bf16.mxu0 0
        %1400 = vmatpush1.bf16.msra.mxu0 0
        %1401 = vmatprep.subr.bf16.mxu0 0
        %1402 = vmatpush1.bf16.msra.mxu0 0
        %1403 = vmatprep.subr.bf16.mxu0 0
        %1404 = vmatpush1.bf16.msra.mxu0 %v1346
        %1405 = vmatprep.subr.bf16.mxu0 0
        %1406 = vmatpush2.bf16.msra.mxu0 0
        %1407 = vmatprep.subr.bf16.mxu0 0
        %1408 = vmatpush2.bf16.msra.mxu0 0
        %1409 = vmatprep.subr.bf16.mxu0 0
        %1410 = vmatpush2.bf16.msra.mxu0 0
        %1411 = vmatprep.subr.bf16.mxu0 0
        %1412 = vmatpush2.bf16.msra.mxu0 0
        %1413 = vmatprep.subr.bf16.mxu0 0
        %1414 = vmatpush2.bf16.msra.mxu0 0
        %1415 = vmatprep.subr.bf16.mxu0 0
        %1416 = vmatpush2.bf16.msra.mxu0 0
        %1417 = vmatprep.subr.bf16.mxu0 0
        %1418 = vmatpush2.bf16.msra.mxu0 0
        %1419 = vmatprep.subr.bf16.mxu0 0
        %1420 = vmatpush2.bf16.msra.mxu0 0
        %1421 = vmatprep.mubr.bf16.mxu0 0
        %1422 = vmatmul.mubr.bf16.gmra.mxu0 %v1337
        %v1423 = vpop.f32.mrf.mxu0
        %v1424 = vadd.f32 %v1331, %v1423
        %v1425 = vpop.f32.mrf.mxu0
        %v1426 = vpop.f32.mrf.mxu0
        %v1427 = vpop.f32.mrf.mxu0
        %1428 = vdwg.mxu0
        %s1429 = scalar_lea.vmem %s3, 8
        %v1430 = vld [vmem:[%s1429] sm:$0xf]
        %1431 = vrot.lane.b32.xlu0 %v1226, 126
        %v1432 = vpop.permute.xlu0 %1431
        %1433 = vrot.lane.b32.xlu0 %v1227, 126
        %v1434 = vpop.permute.xlu0 %1433
        %1435 = vrot.lane.b32.xlu0 %v1228, 126
        %v1436 = vpop.permute.xlu0 %1435
        %v1437 = vsel %vm442, %v1432, %v1434
        %v1438 = vsel %vm442, %v1434, %v1436
        %v1440 = vsel %vm246, %v1430, 0
        %v1443 = vsel %vm250, %v1437, 0
        %v1446 = vsel %vm250, %v1438, 0
        %v1449 = vsel %vm250, %v1436, 0
        %1451 = vmatprep.subr.bf16.mxu0 0
        %1452 = vmatpush1.bf16.msra.mxu0 0
        %1453 = vmatprep.subr.bf16.mxu0 0
        %1454 = vmatpush1.bf16.msra.mxu0 0
        %1455 = vmatprep.subr.bf16.mxu0 0
        %1456 = vmatpush1.bf16.msra.mxu0 0
        %1457 = vmatprep.subr.bf16.mxu0 0
        %1458 = vmatpush1.bf16.msra.mxu0 0
        %1459 = vmatprep.subr.bf16.mxu0 0
        %1460 = vmatpush1.bf16.msra.mxu0 0
        %1461 = vmatprep.subr.bf16.mxu0 0
        %1462 = vmatpush1.bf16.msra.mxu0 0
        %1463 = vmatprep.subr.bf16.mxu0 0
        %1464 = vmatpush1.bf16.msra.mxu0 0
        %1465 = vmatprep.subr.bf16.mxu0 %v1446
        %1466 = vmatpush1.bf16.msra.mxu0 %v1443
        %1467 = vmatprep.subr.bf16.mxu0 0
        %1468 = vmatpush2.bf16.msra.mxu0 0
        %1469 = vmatprep.subr.bf16.mxu0 0
        %1470 = vmatpush2.bf16.msra.mxu0 0
        %1471 = vmatprep.subr.bf16.mxu0 0
        %1472 = vmatpush2.bf16.msra.mxu0 0
        %1473 = vmatprep.subr.bf16.mxu0 0
        %1474 = vmatpush2.bf16.msra.mxu0 0
        %1475 = vmatprep.subr.bf16.mxu0 0
        %1476 = vmatpush2.bf16.msra.mxu0 0
        %1477 = vmatprep.subr.bf16.mxu0 0
        %1478 = vmatpush2.bf16.msra.mxu0 0
        %1479 = vmatprep.subr.bf16.mxu0 0
        %1480 = vmatpush2.bf16.msra.mxu0 0
        %1481 = vmatprep.subr.bf16.mxu0 0
        %1482 = vmatpush2.bf16.msra.mxu0 0
        %1483 = vmatprep.mubr.bf16.mxu0 0
        %1484 = vmatmul.mubr.bf16.gmra.mxu0 %v1440
        %v1485 = vpop.f32.mrf.mxu0
        %v1486 = vadd.f32 0.0, %v1485
        %v1487 = vpop.f32.mrf.mxu0
        %v1488 = vadd.f32 0.0, %v1487
        %v1489 = vpop.f32.mrf.mxu0
        %v1490 = vpop.f32.mrf.mxu0
        %1491 = vdwg.mxu0
        %1492 = vmatprep.subr.bf16.mxu0 0
        %1493 = vmatpush1.bf16.msra.mxu0 0
        %1494 = vmatprep.subr.bf16.mxu0 0
        %1495 = vmatpush1.bf16.msra.mxu0 0
        %1496 = vmatprep.subr.bf16.mxu0 0
        %1497 = vmatpush1.bf16.msra.mxu0 0
        %1498 = vmatprep.subr.bf16.mxu0 0
        %1499 = vmatpush1.bf16.msra.mxu0 0
        %1500 = vmatprep.subr.bf16.mxu0 0
        %1501 = vmatpush1.bf16.msra.mxu0 0
        %1502 = vmatprep.subr.bf16.mxu0 0
        %1503 = vmatpush1.bf16.msra.mxu0 0
        %1504 = vmatprep.subr.bf16.mxu0 0
        %1505 = vmatpush1.bf16.msra.mxu0 0
        %1506 = vmatprep.subr.bf16.mxu0 0
        %1507 = vmatpush1.bf16.msra.mxu0 %v1449
        %1508 = vmatprep.subr.bf16.mxu0 0
        %1509 = vmatpush2.bf16.msra.mxu0 0
        %1510 = vmatprep.subr.bf16.mxu0 0
        %1511 = vmatpush2.bf16.msra.mxu0 0
        %1512 = vmatprep.subr.bf16.mxu0 0
        %1513 = vmatpush2.bf16.msra.mxu0 0
        %1514 = vmatprep.subr.bf16.mxu0 0
        %1515 = vmatpush2.bf16.msra.mxu0 0
        %1516 = vmatprep.subr.bf16.mxu0 0
        %1517 = vmatpush2.bf16.msra.mxu0 0
        %1518 = vmatprep.subr.bf16.mxu0 0
        %1519 = vmatpush2.bf16.msra.mxu0 0
        %1520 = vmatprep.subr.bf16.mxu0 0
        %1521 = vmatpush2.bf16.msra.mxu0 0
        %1522 = vmatprep.subr.bf16.mxu0 0
        %1523 = vmatpush2.bf16.msra.mxu0 0
        %1524 = vmatprep.mubr.bf16.mxu0 0
        %1525 = vmatmul.mubr.bf16.gmra.mxu0 %v1440
        %v1526 = vpop.f32.mrf.mxu0
        %v1527 = vadd.f32 0.0, %v1526
        %v1528 = vpop.f32.mrf.mxu0
        %v1529 = vpop.f32.mrf.mxu0
        %v1530 = vpop.f32.mrf.mxu0
        %1531 = vdwg.mxu0
        %v1532 = vadd.f32 %v1383, %v1486
        %v1533 = vadd.f32 %v1385, %v1488
        %v1534 = vadd.f32 %v1424, %v1527
        %s1535 = scalar_lea.vmem %s3, 12
        %v1536 = vld [vmem:[%s1535] sm:$0xf]
        %1537 = vrot.lane.b32.xlu0 %v1226, 110
        %v1538 = vpop.permute.xlu0 %1537
        %1539 = vrot.lane.b32.xlu0 %v1227, 110
        %v1540 = vpop.permute.xlu0 %1539
        %1541 = vrot.lane.b32.xlu0 %v1228, 110
        %v1542 = vpop.permute.xlu0 %1541
        %v1543 = vsel %vm549, %v1538, %v1540
        %v1544 = vsel %vm549, %v1540, %v1542
        %v1546 = vsel %vm246, %v1536, 0
        %v1549 = vsel %vm250, %v1543, 0
        %v1552 = vsel %vm250, %v1544, 0
        %v1555 = vsel %vm250, %v1542, 0
        %1557 = vmatprep.subr.bf16.mxu0 0
        %1558 = vmatpush1.bf16.msra.mxu0 0
        %1559 = vmatprep.subr.bf16.mxu0 0
        %1560 = vmatpush1.bf16.msra.mxu0 0
        %1561 = vmatprep.subr.bf16.mxu0 0
        %1562 = vmatpush1.bf16.msra.mxu0 0
        %1563 = vmatprep.subr.bf16.mxu0 0
        %1564 = vmatpush1.bf16.msra.mxu0 0
        %1565 = vmatprep.subr.bf16.mxu0 0
        %1566 = vmatpush1.bf16.msra.mxu0 0
        %1567 = vmatprep.subr.bf16.mxu0 0
        %1568 = vmatpush1.bf16.msra.mxu0 0
        %1569 = vmatprep.subr.bf16.mxu0 0
        %1570 = vmatpush1.bf16.msra.mxu0 0
        %1571 = vmatprep.subr.bf16.mxu0 %v1552
        %1572 = vmatpush1.bf16.msra.mxu0 %v1549
        %1573 = vmatprep.subr.bf16.mxu0 0
        %1574 = vmatpush2.bf16.msra.mxu0 0
        %1575 = vmatprep.subr.bf16.mxu0 0
        %1576 = vmatpush2.bf16.msra.mxu0 0
        %1577 = vmatprep.subr.bf16.mxu0 0
        %1578 = vmatpush2.bf16.msra.mxu0 0
        %1579 = vmatprep.subr.bf16.mxu0 0
        %1580 = vmatpush2.bf16.msra.mxu0 0
        %1581 = vmatprep.subr.bf16.mxu0 0
        %1582 = vmatpush2.bf16.msra.mxu0 0
        %1583 = vmatprep.subr.bf16.mxu0 0
        %1584 = vmatpush2.bf16.msra.mxu0 0
        %1585 = vmatprep.subr.bf16.mxu0 0
        %1586 = vmatpush2.bf16.msra.mxu0 0
        %1587 = vmatprep.subr.bf16.mxu0 0
        %1588 = vmatpush2.bf16.msra.mxu0 0
        %1589 = vmatprep.mubr.bf16.mxu0 0
        %1590 = vmatmul.mubr.bf16.gmra.mxu0 %v1546
        %v1591 = vpop.f32.mrf.mxu0
        %v1592 = vadd.f32 0.0, %v1591
        %v1593 = vpop.f32.mrf.mxu0
        %v1594 = vadd.f32 0.0, %v1593
        %v1595 = vpop.f32.mrf.mxu0
        %v1596 = vpop.f32.mrf.mxu0
        %1597 = vdwg.mxu0
        %1598 = vmatprep.subr.bf16.mxu0 0
        %1599 = vmatpush1.bf16.msra.mxu0 0
        %1600 = vmatprep.subr.bf16.mxu0 0
        %1601 = vmatpush1.bf16.msra.mxu0 0
        %1602 = vmatprep.subr.bf16.mxu0 0
        %1603 = vmatpush1.bf16.msra.mxu0 0
        %1604 = vmatprep.subr.bf16.mxu0 0
        %1605 = vmatpush1.bf16.msra.mxu0 0
        %1606 = vmatprep.subr.bf16.mxu0 0
        %1607 = vmatpush1.bf16.msra.mxu0 0
        %1608 = vmatprep.subr.bf16.mxu0 0
        %1609 = vmatpush1.bf16.msra.mxu0 0
        %1610 = vmatprep.subr.bf16.mxu0 0
        %1611 = vmatpush1.bf16.msra.mxu0 0
        %1612 = vmatprep.subr.bf16.mxu0 0
        %1613 = vmatpush1.bf16.msra.mxu0 %v1555
        %1614 = vmatprep.subr.bf16.mxu0 0
        %1615 = vmatpush2.bf16.msra.mxu0 0
        %1616 = vmatprep.subr.bf16.mxu0 0
        %1617 = vmatpush2.bf16.msra.mxu0 0
        %1618 = vmatprep.subr.bf16.mxu0 0
        %1619 = vmatpush2.bf16.msra.mxu0 0
        %1620 = vmatprep.subr.bf16.mxu0 0
        %1621 = vmatpush2.bf16.msra.mxu0 0
        %1622 = vmatprep.subr.bf16.mxu0 0
        %1623 = vmatpush2.bf16.msra.mxu0 0
        %1624 = vmatprep.subr.bf16.mxu0 0
        %1625 = vmatpush2.bf16.msra.mxu0 0
        %1626 = vmatprep.subr.bf16.mxu0 0
        %1627 = vmatpush2.bf16.msra.mxu0 0
        %1628 = vmatprep.subr.bf16.mxu0 0
        %1629 = vmatpush2.bf16.msra.mxu0 0
        %1630 = vmatprep.mubr.bf16.mxu0 0
        %1631 = vmatmul.mubr.bf16.gmra.mxu0 %v1546
        %v1632 = vpop.f32.mrf.mxu0
        %v1633 = vadd.f32 0.0, %v1632
        %v1634 = vpop.f32.mrf.mxu0
        %v1635 = vpop.f32.mrf.mxu0
        %v1636 = vpop.f32.mrf.mxu0
        %1637 = vdwg.mxu0
        %v1638 = vadd.f32 %v1532, %v1592
        %v1639 = vadd.f32 %v1533, %v1594
        %v1640 = vadd.f32 %v1534, %v1633
        %s1641 = scalar_lea.vmem %s3, 16
        %v1642 = vld [vmem:[%s1641] sm:$0xf]
        %1643 = vrot.lane.b32.xlu0 %v1226, 109
        %v1644 = vpop.permute.xlu0 %1643
        %1645 = vrot.lane.b32.xlu0 %v1227, 109
        %v1646 = vpop.permute.xlu0 %1645
        %1647 = vrot.lane.b32.xlu0 %v1228, 109
        %v1648 = vpop.permute.xlu0 %1647
        %v1649 = vsel %vm656, %v1644, %v1646
        %v1650 = vsel %vm656, %v1646, %v1648
        %v1652 = vsel %vm246, %v1642, 0
        %v1655 = vsel %vm250, %v1649, 0
        %v1658 = vsel %vm250, %v1650, 0
        %v1661 = vsel %vm250, %v1648, 0
        %1663 = vmatprep.subr.bf16.mxu0 0
        %1664 = vmatpush1.bf16.msra.mxu0 0
        %1665 = vmatprep.subr.bf16.mxu0 0
        %1666 = vmatpush1.bf16.msra.mxu0 0
        %1667 = vmatprep.subr.bf16.mxu0 0
        %1668 = vmatpush1.bf16.msra.mxu0 0
        %1669 = vmatprep.subr.bf16.mxu0 0
        %1670 = vmatpush1.bf16.msra.mxu0 0
        %1671 = vmatprep.subr.bf16.mxu0 0
        %1672 = vmatpush1.bf16.msra.mxu0 0
        %1673 = vmatprep.subr.bf16.mxu0 0
        %1674 = vmatpush1.bf16.msra.mxu0 0
        %1675 = vmatprep.subr.bf16.mxu0 0
        %1676 = vmatpush1.bf16.msra.mxu0 0
        %1677 = vmatprep.subr.bf16.mxu0 %v1658
        %1678 = vmatpush1.bf16.msra.mxu0 %v1655
        %1679 = vmatprep.subr.bf16.mxu0 0
        %1680 = vmatpush2.bf16.msra.mxu0 0
        %1681 = vmatprep.subr.bf16.mxu0 0
        %1682 = vmatpush2.bf16.msra.mxu0 0
        %1683 = vmatprep.subr.bf16.mxu0 0
        %1684 = vmatpush2.bf16.msra.mxu0 0
        %1685 = vmatprep.subr.bf16.mxu0 0
        %1686 = vmatpush2.bf16.msra.mxu0 0
        %1687 = vmatprep.subr.bf16.mxu0 0
        %1688 = vmatpush2.bf16.msra.mxu0 0
        %1689 = vmatprep.subr.bf16.mxu0 0
        %1690 = vmatpush2.bf16.msra.mxu0 0
        %1691 = vmatprep.subr.bf16.mxu0 0
        %1692 = vmatpush2.bf16.msra.mxu0 0
        %1693 = vmatprep.subr.bf16.mxu0 0
        %1694 = vmatpush2.bf16.msra.mxu0 0
        %1695 = vmatprep.mubr.bf16.mxu0 0
        %1696 = vmatmul.mubr.bf16.gmra.mxu0 %v1652
        %v1697 = vpop.f32.mrf.mxu0
        %v1698 = vadd.f32 0.0, %v1697
        %v1699 = vpop.f32.mrf.mxu0
        %v1700 = vadd.f32 0.0, %v1699
        %v1701 = vpop.f32.mrf.mxu0
        %v1702 = vpop.f32.mrf.mxu0
        %1703 = vdwg.mxu0
        %1704 = vmatprep.subr.bf16.mxu0 0
        %1705 = vmatpush1.bf16.msra.mxu0 0
        %1706 = vmatprep.subr.bf16.mxu0 0
        %1707 = vmatpush1.bf16.msra.mxu0 0
        %1708 = vmatprep.subr.bf16.mxu0 0
        %1709 = vmatpush1.bf16.msra.mxu0 0
        %1710 = vmatprep.subr.bf16.mxu0 0
        %1711 = vmatpush1.bf16.msra.mxu0 0
        %1712 = vmatprep.subr.bf16.mxu0 0
        %1713 = vmatpush1.bf16.msra.mxu0 0
        %1714 = vmatprep.subr.bf16.mxu0 0
        %1715 = vmatpush1.bf16.msra.mxu0 0
        %1716 = vmatprep.subr.bf16.mxu0 0
        %1717 = vmatpush1.bf16.msra.mxu0 0
        %1718 = vmatprep.subr.bf16.mxu0 0
        %1719 = vmatpush1.bf16.msra.mxu0 %v1661
        %1720 = vmatprep.subr.bf16.mxu0 0
        %1721 = vmatpush2.bf16.msra.mxu0 0
        %1722 = vmatprep.subr.bf16.mxu0 0
        %1723 = vmatpush2.bf16.msra.mxu0 0
        %1724 = vmatprep.subr.bf16.mxu0 0
        %1725 = vmatpush2.bf16.msra.mxu0 0
        %1726 = vmatprep.subr.bf16.mxu0 0
        %1727 = vmatpush2.bf16.msra.mxu0 0
        %1728 = vmatprep.subr.bf16.mxu0 0
        %1729 = vmatpush2.bf16.msra.mxu0 0
        %1730 = vmatprep.subr.bf16.mxu0 0
        %1731 = vmatpush2.bf16.msra.mxu0 0
        %1732 = vmatprep.subr.bf16.mxu0 0
        %1733 = vmatpush2.bf16.msra.mxu0 0
        %1734 = vmatprep.subr.bf16.mxu0 0
        %1735 = vmatpush2.bf16.msra.mxu0 0
        %1736 = vmatprep.mubr.bf16.mxu0 0
        %1737 = vmatmul.mubr.bf16.gmra.mxu0 %v1652
        %v1738 = vpop.f32.mrf.mxu0
        %v1739 = vadd.f32 0.0, %v1738
        %v1740 = vpop.f32.mrf.mxu0
        %v1741 = vpop.f32.mrf.mxu0
        %v1742 = vpop.f32.mrf.mxu0
        %1743 = vdwg.mxu0
        %v1744 = vadd.f32 %v1638, %v1698
        %v1745 = vadd.f32 %v1639, %v1700
        %v1746 = vadd.f32 %v1640, %v1739
        %s1747 = scalar_lea.vmem %s3, 20
        %v1748 = vld [vmem:[%s1747] sm:$0xf]
        %1749 = vrot.lane.b32.xlu0 %v1226, 108
        %v1750 = vpop.permute.xlu0 %1749
        %1751 = vrot.lane.b32.xlu0 %v1227, 108
        %v1752 = vpop.permute.xlu0 %1751
        %1753 = vrot.lane.b32.xlu0 %v1228, 108
        %v1754 = vpop.permute.xlu0 %1753
        %v1755 = vsel %vm763, %v1750, %v1752
        %v1756 = vsel %vm763, %v1752, %v1754
        %v1758 = vsel %vm246, %v1748, 0
        %v1761 = vsel %vm250, %v1755, 0
        %v1764 = vsel %vm250, %v1756, 0
        %v1767 = vsel %vm250, %v1754, 0
        %1769 = vmatprep.subr.bf16.mxu0 0
        %1770 = vmatpush1.bf16.msra.mxu0 0
        %1771 = vmatprep.subr.bf16.mxu0 0
        %1772 = vmatpush1.bf16.msra.mxu0 0
        %1773 = vmatprep.subr.bf16.mxu0 0
        %1774 = vmatpush1.bf16.msra.mxu0 0
        %1775 = vmatprep.subr.bf16.mxu0 0
        %1776 = vmatpush1.bf16.msra.mxu0 0
        %1777 = vmatprep.subr.bf16.mxu0 0
        %1778 = vmatpush1.bf16.msra.mxu0 0
        %1779 = vmatprep.subr.bf16.mxu0 0
        %1780 = vmatpush1.bf16.msra.mxu0 0
        %1781 = vmatprep.subr.bf16.mxu0 0
        %1782 = vmatpush1.bf16.msra.mxu0 0
        %1783 = vmatprep.subr.bf16.mxu0 %v1764
        %1784 = vmatpush1.bf16.msra.mxu0 %v1761
        %1785 = vmatprep.subr.bf16.mxu0 0
        %1786 = vmatpush2.bf16.msra.mxu0 0
        %1787 = vmatprep.subr.bf16.mxu0 0
        %1788 = vmatpush2.bf16.msra.mxu0 0
        %1789 = vmatprep.subr.bf16.mxu0 0
        %1790 = vmatpush2.bf16.msra.mxu0 0
        %1791 = vmatprep.subr.bf16.mxu0 0
        %1792 = vmatpush2.bf16.msra.mxu0 0
        %1793 = vmatprep.subr.bf16.mxu0 0
        %1794 = vmatpush2.bf16.msra.mxu0 0
        %1795 = vmatprep.subr.bf16.mxu0 0
        %1796 = vmatpush2.bf16.msra.mxu0 0
        %1797 = vmatprep.subr.bf16.mxu0 0
        %1798 = vmatpush2.bf16.msra.mxu0 0
        %1799 = vmatprep.subr.bf16.mxu0 0
        %1800 = vmatpush2.bf16.msra.mxu0 0
        %1801 = vmatprep.mubr.bf16.mxu0 0
        %1802 = vmatmul.mubr.bf16.gmra.mxu0 %v1758
        %v1803 = vpop.f32.mrf.mxu0
        %v1804 = vadd.f32 0.0, %v1803
        %v1805 = vpop.f32.mrf.mxu0
        %v1806 = vadd.f32 0.0, %v1805
        %v1807 = vpop.f32.mrf.mxu0
        %v1808 = vpop.f32.mrf.mxu0
        %1809 = vdwg.mxu0
        %1810 = vmatprep.subr.bf16.mxu0 0
        %1811 = vmatpush1.bf16.msra.mxu0 0
        %1812 = vmatprep.subr.bf16.mxu0 0
        %1813 = vmatpush1.bf16.msra.mxu0 0
        %1814 = vmatprep.subr.bf16.mxu0 0
        %1815 = vmatpush1.bf16.msra.mxu0 0
        %1816 = vmatprep.subr.bf16.mxu0 0
        %1817 = vmatpush1.bf16.msra.mxu0 0
        %1818 = vmatprep.subr.bf16.mxu0 0
        %1819 = vmatpush1.bf16.msra.mxu0 0
        %1820 = vmatprep.subr.bf16.mxu0 0
        %1821 = vmatpush1.bf16.msra.mxu0 0
        %1822 = vmatprep.subr.bf16.mxu0 0
        %1823 = vmatpush1.bf16.msra.mxu0 0
        %1824 = vmatprep.subr.bf16.mxu0 0
        %1825 = vmatpush1.bf16.msra.mxu0 %v1767
        %1826 = vmatprep.subr.bf16.mxu0 0
        %1827 = vmatpush2.bf16.msra.mxu0 0
        %1828 = vmatprep.subr.bf16.mxu0 0
        %1829 = vmatpush2.bf16.msra.mxu0 0
        %1830 = vmatprep.subr.bf16.mxu0 0
        %1831 = vmatpush2.bf16.msra.mxu0 0
        %1832 = vmatprep.subr.bf16.mxu0 0
        %1833 = vmatpush2.bf16.msra.mxu0 0
        %1834 = vmatprep.subr.bf16.mxu0 0
        %1835 = vmatpush2.bf16.msra.mxu0 0
        %1836 = vmatprep.subr.bf16.mxu0 0
        %1837 = vmatpush2.bf16.msra.mxu0 0
        %1838 = vmatprep.subr.bf16.mxu0 0
        %1839 = vmatpush2.bf16.msra.mxu0 0
        %1840 = vmatprep.subr.bf16.mxu0 0
        %1841 = vmatpush2.bf16.msra.mxu0 0
        %1842 = vmatprep.mubr.bf16.mxu0 0
        %1843 = vmatmul.mubr.bf16.gmra.mxu0 %v1758
        %v1844 = vpop.f32.mrf.mxu0
        %v1845 = vadd.f32 0.0, %v1844
        %v1846 = vpop.f32.mrf.mxu0
        %v1847 = vpop.f32.mrf.mxu0
        %v1848 = vpop.f32.mrf.mxu0
        %1849 = vdwg.mxu0
        %v1850 = vadd.f32 %v1744, %v1804
        %v1851 = vadd.f32 %v1745, %v1806
        %v1852 = vadd.f32 %v1746, %v1845
        %s1853 = scalar_lea.vmem %s3, 24
        %v1854 = vld [vmem:[%s1853] sm:$0xf]
        %1855 = vrot.lane.b32.xlu0 %v1226, 92
        %v1856 = vpop.permute.xlu0 %1855
        %1857 = vrot.lane.b32.xlu0 %v1227, 92
        %v1858 = vpop.permute.xlu0 %1857
        %1859 = vrot.lane.b32.xlu0 %v1228, 92
        %v1860 = vpop.permute.xlu0 %1859
        %v1861 = vsel %vm874, %v1856, %v1858
        %v1862 = vsel %vm874, %v1858, %v1860
        %v1864 = vsel %vm246, %v1854, 0
        %v1867 = vsel %vm250, %v1861, 0
        %v1870 = vsel %vm250, %v1862, 0
        %v1873 = vsel %vm250, %v1860, 0
        %1875 = vmatprep.subr.bf16.mxu0 0
        %1876 = vmatpush1.bf16.msra.mxu0 0
        %1877 = vmatprep.subr.bf16.mxu0 0
        %1878 = vmatpush1.bf16.msra.mxu0 0
        %1879 = vmatprep.subr.bf16.mxu0 0
        %1880 = vmatpush1.bf16.msra.mxu0 0
        %1881 = vmatprep.subr.bf16.mxu0 0
        %1882 = vmatpush1.bf16.msra.mxu0 0
        %1883 = vmatprep.subr.bf16.mxu0 0
        %1884 = vmatpush1.bf16.msra.mxu0 0
        %1885 = vmatprep.subr.bf16.mxu0 0
        %1886 = vmatpush1.bf16.msra.mxu0 0
        %1887 = vmatprep.subr.bf16.mxu0 0
        %1888 = vmatpush1.bf16.msra.mxu0 0
        %1889 = vmatprep.subr.bf16.mxu0 %v1870
        %1890 = vmatpush1.bf16.msra.mxu0 %v1867
        %1891 = vmatprep.subr.bf16.mxu0 0
        %1892 = vmatpush2.bf16.msra.mxu0 0
        %1893 = vmatprep.subr.bf16.mxu0 0
        %1894 = vmatpush2.bf16.msra.mxu0 0
        %1895 = vmatprep.subr.bf16.mxu0 0
        %1896 = vmatpush2.bf16.msra.mxu0 0
        %1897 = vmatprep.subr.bf16.mxu0 0
        %1898 = vmatpush2.bf16.msra.mxu0 0
        %1899 = vmatprep.subr.bf16.mxu0 0
        %1900 = vmatpush2.bf16.msra.mxu0 0
        %1901 = vmatprep.subr.bf16.mxu0 0
        %1902 = vmatpush2.bf16.msra.mxu0 0
        %1903 = vmatprep.subr.bf16.mxu0 0
        %1904 = vmatpush2.bf16.msra.mxu0 0
        %1905 = vmatprep.subr.bf16.mxu0 0
        %1906 = vmatpush2.bf16.msra.mxu0 0
        %1907 = vmatprep.mubr.bf16.mxu0 0
        %1908 = vmatmul.mubr.bf16.gmra.mxu0 %v1864
        %v1909 = vpop.f32.mrf.mxu0
        %v1910 = vadd.f32 0.0, %v1909
        %v1911 = vpop.f32.mrf.mxu0
        %v1912 = vadd.f32 0.0, %v1911
        %v1913 = vpop.f32.mrf.mxu0
        %v1914 = vpop.f32.mrf.mxu0
        %1915 = vdwg.mxu0
        %1916 = vmatprep.subr.bf16.mxu0 0
        %1917 = vmatpush1.bf16.msra.mxu0 0
        %1918 = vmatprep.subr.bf16.mxu0 0
        %1919 = vmatpush1.bf16.msra.mxu0 0
        %1920 = vmatprep.subr.bf16.mxu0 0
        %1921 = vmatpush1.bf16.msra.mxu0 0
        %1922 = vmatprep.subr.bf16.mxu0 0
        %1923 = vmatpush1.bf16.msra.mxu0 0
        %1924 = vmatprep.subr.bf16.mxu0 0
        %1925 = vmatpush1.bf16.msra.mxu0 0
        %1926 = vmatprep.subr.bf16.mxu0 0
        %1927 = vmatpush1.bf16.msra.mxu0 0
        %1928 = vmatprep.subr.bf16.mxu0 0
        %1929 = vmatpush1.bf16.msra.mxu0 0
        %1930 = vmatprep.subr.bf16.mxu0 0
        %1931 = vmatpush1.bf16.msra.mxu0 %v1873
        %1932 = vmatprep.subr.bf16.mxu0 0
        %1933 = vmatpush2.bf16.msra.mxu0 0
        %1934 = vmatprep.subr.bf16.mxu0 0
        %1935 = vmatpush2.bf16.msra.mxu0 0
        %1936 = vmatprep.subr.bf16.mxu0 0
        %1937 = vmatpush2.bf16.msra.mxu0 0
        %1938 = vmatprep.subr.bf16.mxu0 0
        %1939 = vmatpush2.bf16.msra.mxu0 0
        %1940 = vmatprep.subr.bf16.mxu0 0
        %1941 = vmatpush2.bf16.msra.mxu0 0
        %1942 = vmatprep.subr.bf16.mxu0 0
        %1943 = vmatpush2.bf16.msra.mxu0 0
        %1944 = vmatprep.subr.bf16.mxu0 0
        %1945 = vmatpush2.bf16.msra.mxu0 0
        %1946 = vmatprep.subr.bf16.mxu0 0
        %1947 = vmatpush2.bf16.msra.mxu0 0
        %1948 = vmatprep.mubr.bf16.mxu0 0
        %1949 = vmatmul.mubr.bf16.gmra.mxu0 %v1864
        %v1950 = vpop.f32.mrf.mxu0
        %v1951 = vadd.f32 0.0, %v1950
        %v1952 = vpop.f32.mrf.mxu0
        %v1953 = vpop.f32.mrf.mxu0
        %v1954 = vpop.f32.mrf.mxu0
        %1955 = vdwg.mxu0
        %v1956 = vadd.f32 %v1850, %v1910
        %v1957 = vadd.f32 %v1851, %v1912
        %v1958 = vadd.f32 %v1852, %v1951
        %s1959 = scalar_lea.vmem %s3, 28
        %v1960 = vld [vmem:[%s1959] sm:$0xf]
        %1961 = vrot.lane.b32.xlu0 %v1226, 91
        %v1962 = vpop.permute.xlu0 %1961
        %1963 = vrot.lane.b32.xlu0 %v1227, 91
        %v1964 = vpop.permute.xlu0 %1963
        %1965 = vrot.lane.b32.xlu0 %v1228, 91
        %v1966 = vpop.permute.xlu0 %1965
        %v1967 = vsel %vm984, %v1962, %v1964
        %v1968 = vsel %vm984, %v1964, %v1966
        %v1970 = vsel %vm246, %v1960, 0
        %v1973 = vsel %vm250, %v1967, 0
        %v1976 = vsel %vm250, %v1968, 0
        %v1979 = vsel %vm250, %v1966, 0
        %1981 = vmatprep.subr.bf16.mxu0 0
        %1982 = vmatpush1.bf16.msra.mxu0 0
        %1983 = vmatprep.subr.bf16.mxu0 0
        %1984 = vmatpush1.bf16.msra.mxu0 0
        %1985 = vmatprep.subr.bf16.mxu0 0
        %1986 = vmatpush1.bf16.msra.mxu0 0
        %1987 = vmatprep.subr.bf16.mxu0 0
        %1988 = vmatpush1.bf16.msra.mxu0 0
        %1989 = vmatprep.subr.bf16.mxu0 0
        %1990 = vmatpush1.bf16.msra.mxu0 0
        %1991 = vmatprep.subr.bf16.mxu0 0
        %1992 = vmatpush1.bf16.msra.mxu0 0
        %1993 = vmatprep.subr.bf16.mxu0 0
        %1994 = vmatpush1.bf16.msra.mxu0 0
        %1995 = vmatprep.subr.bf16.mxu0 %v1976
        %1996 = vmatpush1.bf16.msra.mxu0 %v1973
        %1997 = vmatprep.subr.bf16.mxu0 0
        %1998 = vmatpush2.bf16.msra.mxu0 0
        %1999 = vmatprep.subr.bf16.mxu0 0
        %2000 = vmatpush2.bf16.msra.mxu0 0
        %2001 = vmatprep.subr.bf16.mxu0 0
        %2002 = vmatpush2.bf16.msra.mxu0 0
        %2003 = vmatprep.subr.bf16.mxu0 0
        %2004 = vmatpush2.bf16.msra.mxu0 0
        %2005 = vmatprep.subr.bf16.mxu0 0
        %2006 = vmatpush2.bf16.msra.mxu0 0
        %2007 = vmatprep.subr.bf16.mxu0 0
        %2008 = vmatpush2.bf16.msra.mxu0 0
        %2009 = vmatprep.subr.bf16.mxu0 0
        %2010 = vmatpush2.bf16.msra.mxu0 0
        %2011 = vmatprep.subr.bf16.mxu0 0
        %2012 = vmatpush2.bf16.msra.mxu0 0
        %2013 = vmatprep.mubr.bf16.mxu0 0
        %2014 = vmatmul.mubr.bf16.gmra.mxu0 %v1970
        %v2015 = vpop.f32.mrf.mxu0
        %v2016 = vadd.f32 0.0, %v2015
        %v2017 = vpop.f32.mrf.mxu0
        %v2018 = vadd.f32 0.0, %v2017
        %v2019 = vpop.f32.mrf.mxu0
        %v2020 = vpop.f32.mrf.mxu0
        %2021 = vdwg.mxu0
        %2022 = vmatprep.subr.bf16.mxu0 0
        %2023 = vmatpush1.bf16.msra.mxu0 0
        %2024 = vmatprep.subr.bf16.mxu0 0
        %2025 = vmatpush1.bf16.msra.mxu0 0
        %2026 = vmatprep.subr.bf16.mxu0 0
        %2027 = vmatpush1.bf16.msra.mxu0 0
        %2028 = vmatprep.subr.bf16.mxu0 0
        %2029 = vmatpush1.bf16.msra.mxu0 0
        %2030 = vmatprep.subr.bf16.mxu0 0
        %2031 = vmatpush1.bf16.msra.mxu0 0
        %2032 = vmatprep.subr.bf16.mxu0 0
        %2033 = vmatpush1.bf16.msra.mxu0 0
        %2034 = vmatprep.subr.bf16.mxu0 0
        %2035 = vmatpush1.bf16.msra.mxu0 0
        %2036 = vmatprep.subr.bf16.mxu0 0
        %2037 = vmatpush1.bf16.msra.mxu0 %v1979
        %2038 = vmatprep.subr.bf16.mxu0 0
        %2039 = vmatpush2.bf16.msra.mxu0 0
        %2040 = vmatprep.subr.bf16.mxu0 0
        %2041 = vmatpush2.bf16.msra.mxu0 0
        %2042 = vmatprep.subr.bf16.mxu0 0
        %2043 = vmatpush2.bf16.msra.mxu0 0
        %2044 = vmatprep.subr.bf16.mxu0 0
        %2045 = vmatpush2.bf16.msra.mxu0 0
        %2046 = vmatprep.subr.bf16.mxu0 0
        %2047 = vmatpush2.bf16.msra.mxu0 0
        %2048 = vmatprep.subr.bf16.mxu0 0
        %2049 = vmatpush2.bf16.msra.mxu0 0
        %2050 = vmatprep.subr.bf16.mxu0 0
        %2051 = vmatpush2.bf16.msra.mxu0 0
        %2052 = vmatprep.subr.bf16.mxu0 0
        %2053 = vmatpush2.bf16.msra.mxu0 0
        %2054 = vmatprep.mubr.bf16.mxu0 0
        %2055 = vmatmul.mubr.bf16.gmra.mxu0 %v1970
        %v2056 = vpop.f32.mrf.mxu0
        %v2057 = vadd.f32 0.0, %v2056
        %v2058 = vpop.f32.mrf.mxu0
        %v2059 = vpop.f32.mrf.mxu0
        %v2060 = vpop.f32.mrf.mxu0
        %2061 = vdwg.mxu0
        %v2062 = vadd.f32 %v1956, %v2016
        %v2063 = vadd.f32 %v1957, %v2018
        %v2064 = vadd.f32 %v1958, %v2057
        %s2065 = scalar_lea.vmem %s3, 32
        %v2066 = vld [vmem:[%s2065] sm:$0xf]
        %2067 = vrot.lane.b32.xlu0 %v1226, 90
        %v2068 = vpop.permute.xlu0 %2067
        %2069 = vrot.lane.b32.xlu0 %v1227, 90
        %v2070 = vpop.permute.xlu0 %2069
        %2071 = vrot.lane.b32.xlu0 %v1228, 90
        %v2072 = vpop.permute.xlu0 %2071
        %v2073 = vsel %vm1094, %v2068, %v2070
        %v2074 = vsel %vm1094, %v2070, %v2072
        %v2076 = vsel %vm246, %v2066, 0
        %v2079 = vsel %vm250, %v2073, 0
        %v2082 = vsel %vm250, %v2074, 0
        %v2085 = vsel %vm250, %v2072, 0
        %2087 = vmatprep.subr.bf16.mxu0 0
        %2088 = vmatpush1.bf16.msra.mxu0 0
        %2089 = vmatprep.subr.bf16.mxu0 0
        %2090 = vmatpush1.bf16.msra.mxu0 0
        %2091 = vmatprep.subr.bf16.mxu0 0
        %2092 = vmatpush1.bf16.msra.mxu0 0
        %2093 = vmatprep.subr.bf16.mxu0 0
        %2094 = vmatpush1.bf16.msra.mxu0 0
        %2095 = vmatprep.subr.bf16.mxu0 0
        %2096 = vmatpush1.bf16.msra.mxu0 0
        %2097 = vmatprep.subr.bf16.mxu0 0
        %2098 = vmatpush1.bf16.msra.mxu0 0
        %2099 = vmatprep.subr.bf16.mxu0 0
        %2100 = vmatpush1.bf16.msra.mxu0 0
        %2101 = vmatprep.subr.bf16.mxu0 %v2082
        %2102 = vmatpush1.bf16.msra.mxu0 %v2079
        %2103 = vmatprep.subr.bf16.mxu0 0
        %2104 = vmatpush2.bf16.msra.mxu0 0
        %2105 = vmatprep.subr.bf16.mxu0 0
        %2106 = vmatpush2.bf16.msra.mxu0 0
        %2107 = vmatprep.subr.bf16.mxu0 0
        %2108 = vmatpush2.bf16.msra.mxu0 0
        %2109 = vmatprep.subr.bf16.mxu0 0
        %2110 = vmatpush2.bf16.msra.mxu0 0
        %2111 = vmatprep.subr.bf16.mxu0 0
        %2112 = vmatpush2.bf16.msra.mxu0 0
        %2113 = vmatprep.subr.bf16.mxu0 0
        %2114 = vmatpush2.bf16.msra.mxu0 0
        %2115 = vmatprep.subr.bf16.mxu0 0
        %2116 = vmatpush2.bf16.msra.mxu0 0
        %2117 = vmatprep.subr.bf16.mxu0 0
        %2118 = vmatpush2.bf16.msra.mxu0 0
        %2119 = vmatprep.mubr.bf16.mxu0 0
        %2120 = vmatmul.mubr.bf16.gmra.mxu0 %v2076
        %v2121 = vpop.f32.mrf.mxu0
        %v2122 = vadd.f32 0.0, %v2121
        %v2123 = vpop.f32.mrf.mxu0
        %v2124 = vadd.f32 0.0, %v2123
        %v2125 = vpop.f32.mrf.mxu0
        %v2126 = vpop.f32.mrf.mxu0
        %2127 = vdwg.mxu0
        %2128 = vmatprep.subr.bf16.mxu0 0
        %2129 = vmatpush1.bf16.msra.mxu0 0
        %2130 = vmatprep.subr.bf16.mxu0 0
        %2131 = vmatpush1.bf16.msra.mxu0 0
        %2132 = vmatprep.subr.bf16.mxu0 0
        %2133 = vmatpush1.bf16.msra.mxu0 0
        %2134 = vmatprep.subr.bf16.mxu0 0
        %2135 = vmatpush1.bf16.msra.mxu0 0
        %2136 = vmatprep.subr.bf16.mxu0 0
        %2137 = vmatpush1.bf16.msra.mxu0 0
        %2138 = vmatprep.subr.bf16.mxu0 0
        %2139 = vmatpush1.bf16.msra.mxu0 0
        %2140 = vmatprep.subr.bf16.mxu0 0
        %2141 = vmatpush1.bf16.msra.mxu0 0
        %2142 = vmatprep.subr.bf16.mxu0 0
        %2143 = vmatpush1.bf16.msra.mxu0 %v2085
        %2144 = vmatprep.subr.bf16.mxu0 0
        %2145 = vmatpush2.bf16.msra.mxu0 0
        %2146 = vmatprep.subr.bf16.mxu0 0
        %2147 = vmatpush2.bf16.msra.mxu0 0
        %2148 = vmatprep.subr.bf16.mxu0 0
        %2149 = vmatpush2.bf16.msra.mxu0 0
        %2150 = vmatprep.subr.bf16.mxu0 0
        %2151 = vmatpush2.bf16.msra.mxu0 0
        %2152 = vmatprep.subr.bf16.mxu0 0
        %2153 = vmatpush2.bf16.msra.mxu0 0
        %2154 = vmatprep.subr.bf16.mxu0 0
        %2155 = vmatpush2.bf16.msra.mxu0 0
        %2156 = vmatprep.subr.bf16.mxu0 0
        %2157 = vmatpush2.bf16.msra.mxu0 0
        %2158 = vmatprep.subr.bf16.mxu0 0
        %2159 = vmatpush2.bf16.msra.mxu0 0
        %2160 = vmatprep.mubr.bf16.mxu0 0
        %2161 = vmatmul.mubr.bf16.gmra.mxu0 %v2076
        %v2162 = vpop.f32.mrf.mxu0
        %v2163 = vadd.f32 0.0, %v2162
        %v2164 = vpop.f32.mrf.mxu0
        %v2165 = vpop.f32.mrf.mxu0
        %v2166 = vpop.f32.mrf.mxu0
        %2167 = vdwg.mxu0
        %v2168 = vadd.f32 %v2062, %v2122
        %v2169 = vadd.f32 %v2063, %v2124
        %v2170 = vadd.f32 %v2064, %v2163
        %2171 = vst [vmem:[%s217] sm:$0xff] %v2168
        %2172 = vst [vmem:[%s217 + $0x8] sm:$0xff] %v2169
        %vm2173 = vcmask 556032
        %2174 = vst.msk [vmem:[%s217 + $0x10] sm:$0xff] %vm2173, %v2170
        %s2175 = sand.u32 %s137, 1
        %s2176 = scalar_lea.sflag [#allocation3], %s2175
        %s2177 = sand.u32 %s137, 1
        %s2178 = smul.addr %s2177, 24
        %s2179 = scalar_lea.vmem [#allocation2], %s2178
        // Predicated region
        $region41: #{tpu_custom_call.1} parent=39 // pred_check
          %p2180 = pneg %p147
        $region42: #{tpu_custom_call.1} parent=39 // pred_check_branch
          %2182 = sbr.rel (%p2180) target = $region44
        $region43: #{tpu_custom_call.1} parent=39 // pred_region
          %s2184 = ssub.s32 384, 384
          %2185 = vsyncadd %s2176, %s2184
          %s2186 = smul.addr %s19, 3
          %s2187 = smul.addr %s2186, 128
          %s2188 = scalar_lea.hbm %s5, %s2187
          %s2190 = sshll.u32 %s2179, 4
          %s2191 = int_to_ptr.vmem [resolvable:$true] %s2190
          %2193 = dma.vmem_to_hbm [thread:$0]  %s2191, 384, %s2188, %s2176
        $region44: #{tpu_custom_call.1} parent=39 // pred_fallthru
          _
      $region40: #{tpu_custom_call.1} parent=5 // pred_fallthru
        _
      %p2194 = scmp.le.s32.totalorder 2, %s14
      // Predicated region
      $region45: #{tpu_custom_call.1} parent=5 // pred_check
        %p2195 = pneg %p2194
      $region46: #{tpu_custom_call.1} parent=5 // pred_check_branch
        %2197 = sbr.rel (%p2195) target = $region48
      $region47: #{tpu_custom_call.1} parent=5 // pred_region
        %s2198 = ssub.s32 %s14, 2
        // Predicated region
        $region49: #{tpu_custom_call.1} parent=47 // pred_check
          %p2199 = pneg %p153
        $region50: #{tpu_custom_call.1} parent=47 // pred_check_branch
          %2201 = sbr.rel (%p2199) target = $region52
        $region51: #{tpu_custom_call.1} parent=47 // pred_region
          %s2202 = sand.u32 %s138, 1
          %s2203 = scalar_lea.sflag [#allocation3], %s2202
          %s2204 = sand.u32 %s138, 1
          %s2205 = smul.addr %s2204, 24
          %s2206 = scalar_lea.vmem [#allocation2], %s2205
          %2207 = dma.done %s2203, 384
        $region52: #{tpu_custom_call.1} parent=47 // pred_fallthru
          _
      $region48: #{tpu_custom_call.1} parent=5 // pred_fallthru
        _
    $region6: #{tpu_custom_call.1} parent=1 // loop_footer
      %s18 = sadd.s32 1, %s14
    $region7: #{tpu_custom_call.1} parent=1 // loop_footer_branch
      %13 = sbr.rel target = $region3
    $region8: #{tpu_custom_call.1} parent=1 // loop_exit
      _
    %2208 = vsyncpa [#allocation3], 1
    %s2209 = scalar_lea.sflag [#allocation3], 1
    %2210 = vsyncpa %s2209, 1

</llo_original>
